<compile_context>
chip_gen: v7x
topology: tpu7x:2x2x1
jax: 0.10.0
libtpu: 0.0.40
codegen_flags: <defaults>
</compile_context>

<pallas_src>
import functools

import numpy as np
import jax
import jax.numpy as jnp
from jax.experimental import pallas as pl
from jax.experimental.pallas import tpu as pltpu


# ------------------------------ fused kernel ----------------------------------

def _fused_kernel(x_ref, lw_ref, lb_ref, bank_ref, cw_ref, o_ref, *, H, W):
    """One batch element per grid step.

    x_ref:    (C, H*W)     input image: channels on sublanes, spatial on lanes
    lw_ref:   (L, C)       linear weight (original PyTorch layout)
    lb_ref:   (L, 1)       linear bias (column)
    bank_ref: (L, D, H*W)  prompt bank, already bilinearly resized to (H, W)
    cw_ref:   (9, D, D)    conv weights as [tap, out_ch, in_ch]
    o_ref:    (D, H*W)     output (lane dense); wrapper reshapes to NCHW for free
    """
    C, HW = x_ref.shape
    L = lw_ref.shape[0]
    D = o_ref.shape[0]

    # ---- Stage 1: global average pool + linear + softmax -> prompt weights.
    x = x_ref[...].astype(jnp.float32)                        # (C, HW)
    emb = jnp.mean(x, axis=1, keepdims=True)                  # (C, 1) lane reduce
    logits = jnp.dot(lw_ref[...], emb,
                     preferred_element_type=jnp.float32) + lb_ref[...]   # (L, 1)
    m = jnp.max(logits, axis=0, keepdims=True)
    e = jnp.exp(logits - m)
    denom = jnp.sum(e, axis=0, keepdims=True)
    w = e * pl.reciprocal(denom, approx=True)                 # (L, 1) softmax

    # ---- Stages 2+3: weighted sum of the pre-resized prompt bank.
    # interp(sum_l w_l P_l) == sum_l w_l interp(P_l); the resize was folded into
    # `bank` at init time, so this is just L scale+adds on the VPU.
    prompt = bank_ref[0] * w[0, 0]
    for l in range(1, L):
        prompt = prompt + bank_ref[l] * w[l, 0]               # (D, HW)

    # ---- Stage 4: 3x3 conv (padding=1, no bias), spatial on the lane axis.
    # Shifts are lane rotations (XLU); the zero-padding halo is a border mask
    # built from an iota; channel mixing is one (D,D)@(D,HW) matmul per tap.
    col = jax.lax.broadcasted_iota(jnp.int32, (D, HW), 1)     # flat spatial idx
    wcol = col % W                                            # column index
    acc = jnp.zeros((D, HW), jnp.float32)
    for dy in (-1, 0, 1):
        for dx in (-1, 0, 1):
            k = (dy + 1) * 3 + (dx + 1)
            s = dy * W + dx                                   # flat shift
            if s == 0:
                tap = prompt
            else:
                shifted = pltpu.roll(prompt, (-s) % HW, axis=1)
                conds = []
                if dy == -1:
                    conds.append(col >= W)                    # h - 1 >= 0
                elif dy == 1:
                    conds.append(col < (H - 1) * W)           # h + 1 <= H-1
                if dx == -1:
                    conds.append(wcol >= 1)                   # w - 1 >= 0
                elif dx == 1:
                    conds.append(wcol <= W - 2)               # w + 1 <= W-1
                valid = conds[0]
                for c in conds[1:]:
                    valid = valid & c
                tap = jnp.where(valid, shifted, 0.0)
            acc = acc + jnp.dot(cw_ref[k], tap,
                                preferred_element_type=jnp.float32)
    o_ref[...] = acc.astype(o_ref.dtype)


# --------------------------------- glue ----------------------------------------

def _interp_matrix(out_size, in_size):
    """PyTorch F.interpolate(mode='bilinear', align_corners=False) row weights."""
    scale = in_size / out_size
    i = np.arange(out_size)
    src = np.maximum((i + 0.5) * scale - 0.5, 0.0)
    i0 = np.minimum(np.floor(src).astype(np.int64), in_size - 1)
    i1 = np.minimum(i0 + 1, in_size - 1)
    lam = (src - i0).astype(np.float32)
    R = np.zeros((out_size, in_size), np.float32)
    R[i, i0] += (1.0 - lam)
    R[i, i1] += lam
    return jnp.asarray(R)


def init_prompt_gen_params(prompt_param, lin_w, lin_b, conv_w, H, W):
    """One-time parameter preprocessing (hoisted out of the per-call hot path)."""
    _, L, D, ps, _ = prompt_param.shape
    ry = _interp_matrix(H, ps)                                 # (H, ps)
    rx = _interp_matrix(W, ps)                                 # (W, ps)
    # Pre-resize the (batch independent) prompt bank to the target resolution.
    bank = jnp.einsum('hi,ldij,wj->ldhw', ry,
                      prompt_param[0].astype(jnp.float32), rx)
    bank = bank.reshape(L, D, H * W)                           # (L, D, H*W)
    # Conv weights as (tap, out_ch, in_ch): OIHW -> (ky, kx, O, I) -> (9, O, I)
    cw9 = jnp.transpose(conv_w.astype(jnp.float32), (2, 3, 0, 1)).reshape(9, D, D)
    lin_w = lin_w.astype(jnp.float32)                          # (L, C)
    lin_b = lin_b.astype(jnp.float32).reshape(L, 1)            # (L, 1)
    return lin_w, lin_b, bank, cw9


def prompt_gen_block(x, lin_w, lin_b, bank, cw9):
    """Fused forward. x: (B, C, H, W) NCHW. Returns (B, D, H, W) float32."""
    B, C, H, W = x.shape
    L, D, HW = bank.shape
    assert HW == H * W

    x_flat = x.reshape(B, C, HW)                               # free (contiguous)
    kernel = functools.partial(_fused_kernel, H=H, W=W)

    out = pl.pallas_call(
        kernel,
        grid=(B,),
        in_specs=[
            pl.BlockSpec((None, C, HW), lambda b: (b, 0, 0)),      # x (per batch)
            pl.BlockSpec((L, C), lambda b: (0, 0)),                # lin_w
            pl.BlockSpec((L, 1), lambda b: (0, 0)),                # lin_b
            pl.BlockSpec((L, D, HW), lambda b: (0, 0, 0)),         # resized bank
            pl.BlockSpec((9, D, D), lambda b: (0, 0, 0)),          # conv weights
        ],
        out_specs=pl.BlockSpec((None, D, HW), lambda b: (b, 0, 0)),
        out_shape=jax.ShapeDtypeStruct((B, D, HW), jnp.float32),
        compiler_params=pltpu.CompilerParams(
            dimension_semantics=("parallel",)),                    # v7x: 2 TCs
    )(x_flat, lin_w, lin_b, bank, cw9)

    return out.reshape(B, D, H, W)                             # free (contiguous)
    # TODO(synk): for production C*H*W per image approaching the VMEM limit,
    # additionally tile stage 1 over H inside the kernel (row-block GAP).


# ------------------------- pure-JAX reference (check) ---------------------------

def _reference(x, prompt_param, lin_w, lin_b, conv_w):
    B, C, H, W = x.shape
    _, L, D, ps, _ = prompt_param.shape
    emb = x.mean(axis=(2, 3))
    weights = jax.nn.softmax(emb @ lin_w.T + lin_b, axis=1)
    prompt = jnp.einsum('bl,ldij->bdij', weights, prompt_param[0])
    ry = _interp_matrix(H, ps)
    rx = _interp_matrix(W, ps)
    interp = jnp.einsum('hi,bdij,wj->bdhw', ry, prompt, rx)
    out = jax.lax.conv_general_dilated(
        interp, conv_w, window_strides=(1, 1), padding='SAME',
        dimension_numbers=('NCHW', 'OIHW', 'NCHW'))
    return out


# ----------------------------------- main ----------------------------------------

if __name__ == "__main__":
    # Small shapes consistent with the module (lin_dim == input channels C)
    B, H, W = 2, 16, 16
    prompt_len, prompt_dim, prompt_size, lin_dim = 5, 8, 8, 16

    key = jax.random.PRNGKey(0)
    k1, k2, k3, k4, k5 = jax.random.split(key, 5)

    # Deterministic synthetic parameters (shapes match nn.Module.__init__)
    prompt_param = jax.random.uniform(
        k1, (1, prompt_len, prompt_dim, prompt_size, prompt_size), jnp.float32)
    lb = 1.0 / np.sqrt(lin_dim)
    lin_w = jax.random.uniform(k2, (prompt_len, lin_dim), jnp.float32, -lb, lb)
    lin_b = jax.random.uniform(k3, (prompt_len,), jnp.float32, -lb, lb)
    cb = 1.0 / np.sqrt(prompt_dim * 9)
    conv_w = jax.random.uniform(
        k4, (prompt_dim, prompt_dim, 3, 3), jnp.float32, -cb, cb)

    x = jax.random.normal(k5, (B, lin_dim, H, W), jnp.float32)

    # One-time preprocessing (hoisted), then the single fused kernel call.
    params = init_prompt_gen_params(prompt_param, lin_w, lin_b, conv_w, H, W)
    out = prompt_gen_block(x, *params)
    out = jax.block_until_ready(out)

    ref = jax.block_until_ready(_reference(x, prompt_param, lin_w, lin_b, conv_w))
    assert out.shape == (B, prompt_dim, H, W)
    np.testing.assert_allclose(np.asarray(out), np.asarray(ref),
                               rtol=2e-3, atol=2e-3)

    print("KERNEL_OK")
</pallas_src>

<mosaic_0001>
module attributes {stable_mosaic.version = 11 : i64} {
  func.func @_fused_kernel(%arg0: i32, %arg1: memref<1x16x256xf32, #tpu.memory_space<vmem>>, %arg2: memref<5x16xf32, #tpu.memory_space<vmem>>, %arg3: memref<5x1xf32, #tpu.memory_space<vmem>>, %arg4: memref<5x8x256xf32, #tpu.memory_space<vmem>>, %arg5: memref<9x8x8xf32, #tpu.memory_space<vmem>>, %arg6: memref<1x8x256xf32, #tpu.memory_space<vmem>>) attributes {dimension_semantics = [#tpu.dimension_semantics<parallel>], iteration_bounds = array<i64: 2>, scalar_prefetch = 0 : i64, scratch_operands = 0 : i64, tpu.core_type = #tpu.core_type<tc>, window_params = [{transform_indices = @transform_0, window_bounds = array<i64: 1, 16, 256>}, {pipeline_mode = #tpu.pipeline_mode<synchronous>, transform_indices = @transform_1, window_bounds = array<i64: 5, 16>}, {pipeline_mode = #tpu.pipeline_mode<synchronous>, transform_indices = @transform_2, window_bounds = array<i64: 5, 1>}, {pipeline_mode = #tpu.pipeline_mode<synchronous>, transform_indices = @transform_3, window_bounds = array<i64: 5, 8, 256>}, {pipeline_mode = #tpu.pipeline_mode<synchronous>, transform_indices = @transform_4, window_bounds = array<i64: 9, 8, 8>}, {transform_indices = @transform_5, window_bounds = array<i64: 1, 8, 256>}]} {
    %c0 = arith.constant 0 : index
    %c0_0 = arith.constant 0 : index
    %c0_1 = arith.constant 0 : index
    %0 = vector.load %arg1[%c0, %c0_0, %c0_1] : memref<1x16x256xf32, #tpu.memory_space<vmem>>, vector<1x16x256xf32>
    %1 = vector.shape_cast %0 : vector<1x16x256xf32> to vector<16x256xf32>
    %cst = arith.constant dense<0.000000e+00> : vector<16xf32>
    %2 = vector.multi_reduction <add>, %1, %cst [1] : vector<16x256xf32> to vector<16xf32>
    %3 = vector.shape_cast %2 : vector<16xf32> to vector<16x1xf32>
    %cst_2 = arith.constant 2.560000e+02 : f32
    %4 = vector.broadcast %cst_2 : f32 to vector<16x1xf32>
    %5 = arith.divf %3, %4 : vector<16x1xf32>
    %c0_3 = arith.constant 0 : index
    %c0_4 = arith.constant 0 : index
    %6 = vector.load %arg2[%c0_3, %c0_4] : memref<5x16xf32, #tpu.memory_space<vmem>>, vector<5x16xf32>
    %cst_5 = arith.constant dense<0.000000e+00> : vector<5x1xf32>
    %7 = tpu.matmul %6, %5, %cst_5 {dimension_numbers = #tpu.dot_dimension_numbers<[1], [0], [0], [1], [0, 0, 1, 1], [], []>} : vector<5x16xf32>, vector<16x1xf32>, vector<5x1xf32> -> vector<5x1xf32>
    %c0_6 = arith.constant 0 : index
    %c0_7 = arith.constant 0 : index
    %8 = vector.load %arg3[%c0_6, %c0_7] : memref<5x1xf32, #tpu.memory_space<vmem>>, vector<5x1xf32>
    %9 = arith.addf %7, %8 : vector<5x1xf32>
    %cst_8 = arith.constant dense<0xFF800000> : vector<1xf32>
    %10 = vector.multi_reduction <maximumf>, %9, %cst_8 [0] : vector<5x1xf32> to vector<1xf32>
    %11 = vector.shape_cast %10 : vector<1xf32> to vector<1x1xf32>
    %12 = vector.broadcast %11 : vector<1x1xf32> to vector<5x1xf32>
    %13 = arith.subf %9, %12 : vector<5x1xf32>
    %14 = math.exp %13 : vector<5x1xf32>
    %cst_9 = arith.constant dense<0.000000e+00> : vector<1xf32>
    %15 = vector.multi_reduction <add>, %14, %cst_9 [0] : vector<5x1xf32> to vector<1xf32>
    %16 = vector.shape_cast %15 : vector<1xf32> to vector<1x1xf32>
    %17 = tpu.reciprocal %16 {approx = true} : vector<1x1xf32> -> vector<1x1xf32>
    %18 = vector.broadcast %17 : vector<1x1xf32> to vector<5x1xf32>
    %19 = arith.mulf %14, %18 : vector<5x1xf32>
    %c0_10 = arith.constant 0 : index
    %c0_11 = arith.constant 0 : index
    %c0_12 = arith.constant 0 : index
    %20 = vector.load %arg4[%c0_10, %c0_11, %c0_12] : memref<5x8x256xf32, #tpu.memory_space<vmem>>, vector<1x8x256xf32>
    %21 = vector.shape_cast %20 : vector<1x8x256xf32> to vector<8x256xf32>
    %22 = vector.extract_strided_slice %19 {offsets = [0, 0], sizes = [1, 1], strides = [1, 1]} : vector<5x1xf32> to vector<1x1xf32>
    %23 = vector.extract %22[0, 0] : f32 from vector<1x1xf32>
    %24 = vector.broadcast %23 : f32 to vector<8x256xf32>
    %25 = arith.mulf %21, %24 : vector<8x256xf32>
    %c1 = arith.constant 1 : index
    %c0_13 = arith.constant 0 : index
    %c0_14 = arith.constant 0 : index
    %26 = vector.load %arg4[%c1, %c0_13, %c0_14] : memref<5x8x256xf32, #tpu.memory_space<vmem>>, vector<1x8x256xf32>
    %27 = vector.shape_cast %26 : vector<1x8x256xf32> to vector<8x256xf32>
    %28 = vector.extract_strided_slice %19 {offsets = [1, 0], sizes = [1, 1], strides = [1, 1]} : vector<5x1xf32> to vector<1x1xf32>
    %29 = vector.extract %28[0, 0] : f32 from vector<1x1xf32>
    %30 = vector.broadcast %29 : f32 to vector<8x256xf32>
    %31 = arith.mulf %27, %30 : vector<8x256xf32>
    %32 = arith.addf %25, %31 : vector<8x256xf32>
    %c2 = arith.constant 2 : index
    %c0_15 = arith.constant 0 : index
    %c0_16 = arith.constant 0 : index
    %33 = vector.load %arg4[%c2, %c0_15, %c0_16] : memref<5x8x256xf32, #tpu.memory_space<vmem>>, vector<1x8x256xf32>
    %34 = vector.shape_cast %33 : vector<1x8x256xf32> to vector<8x256xf32>
    %35 = vector.extract_strided_slice %19 {offsets = [2, 0], sizes = [1, 1], strides = [1, 1]} : vector<5x1xf32> to vector<1x1xf32>
    %36 = vector.extract %35[0, 0] : f32 from vector<1x1xf32>
    %37 = vector.broadcast %36 : f32 to vector<8x256xf32>
    %38 = arith.mulf %34, %37 : vector<8x256xf32>
    %39 = arith.addf %32, %38 : vector<8x256xf32>
    %c3 = arith.constant 3 : index
    %c0_17 = arith.constant 0 : index
    %c0_18 = arith.constant 0 : index
    %40 = vector.load %arg4[%c3, %c0_17, %c0_18] : memref<5x8x256xf32, #tpu.memory_space<vmem>>, vector<1x8x256xf32>
    %41 = vector.shape_cast %40 : vector<1x8x256xf32> to vector<8x256xf32>
    %42 = vector.extract_strided_slice %19 {offsets = [3, 0], sizes = [1, 1], strides = [1, 1]} : vector<5x1xf32> to vector<1x1xf32>
    %43 = vector.extract %42[0, 0] : f32 from vector<1x1xf32>
    %44 = vector.broadcast %43 : f32 to vector<8x256xf32>
    %45 = arith.mulf %41, %44 : vector<8x256xf32>
    %46 = arith.addf %39, %45 : vector<8x256xf32>
    %c4 = arith.constant 4 : index
    %c0_19 = arith.constant 0 : index
    %c0_20 = arith.constant 0 : index
    %47 = vector.load %arg4[%c4, %c0_19, %c0_20] : memref<5x8x256xf32, #tpu.memory_space<vmem>>, vector<1x8x256xf32>
    %48 = vector.shape_cast %47 : vector<1x8x256xf32> to vector<8x256xf32>
    %49 = vector.extract_strided_slice %19 {offsets = [4, 0], sizes = [1, 1], strides = [1, 1]} : vector<5x1xf32> to vector<1x1xf32>
    %50 = vector.extract %49[0, 0] : f32 from vector<1x1xf32>
    %51 = vector.broadcast %50 : f32 to vector<8x256xf32>
    %52 = arith.mulf %48, %51 : vector<8x256xf32>
    %53 = arith.addf %46, %52 : vector<8x256xf32>
    %54 = tpu.iota {dimensions = array<i32: 1>} : vector<8x256xi32>
    %c16_i32 = arith.constant 16 : i32
    %c0_i32 = arith.constant 0 : i32
    %55 = arith.cmpi eq, %c16_i32, %c0_i32 : i32
    %c1_i32 = arith.constant 1 : i32
    %56 = arith.select %55, %c1_i32, %c16_i32 : i32
    %57 = vector.broadcast %56 : i32 to vector<8x256xi32>
    %58 = arith.remsi %54, %57 : vector<8x256xi32>
    %c0_i32_21 = arith.constant 0 : i32
    %59 = vector.broadcast %c0_i32_21 : i32 to vector<8x256xi32>
    %60 = arith.cmpi ne, %58, %59 : vector<8x256xi32>
    %c0_i32_22 = arith.constant 0 : i32
    %61 = vector.broadcast %c0_i32_22 : i32 to vector<8x256xi32>
    %62 = arith.cmpi slt, %58, %61 : vector<8x256xi32>
    %c0_i32_23 = arith.constant 0 : i32
    %63 = arith.cmpi slt, %56, %c0_i32_23 : i32
    %64 = vector.broadcast %63 : i1 to vector<8x256xi1>
    %65 = vector.broadcast %64 : vector<8x256xi1> to vector<8x256xi1>
    %66 = arith.xori %62, %65 : vector<8x256xi1>
    %67 = arith.andi %66, %60 : vector<8x256xi1>
    %68 = vector.broadcast %56 : i32 to vector<8x256xi32>
    %69 = arith.addi %58, %68 : vector<8x256xi32>
    %70 = arith.select %67, %69, %58 : vector<8x256xi1>, vector<8x256xi32>
    %cst_24 = arith.constant 0.000000e+00 : f32
    %71 = vector.broadcast %cst_24 : f32 to vector<8x256xf32>
    %c17_i32 = arith.constant 17 : i32
    %72 = tpu.dynamic_rotate %53 by %c17_i32 dim 1 : vector<8x256xf32>, i32 -> vector<8x256xf32>
    %c16_i32_25 = arith.constant 16 : i32
    %73 = vector.broadcast %c16_i32_25 : i32 to vector<8x256xi32>
    %74 = arith.cmpi sge, %54, %73 : vector<8x256xi32>
    %c1_i32_26 = arith.constant 1 : i32
    %75 = vector.broadcast %c1_i32_26 : i32 to vector<8x256xi32>
    %76 = arith.cmpi sge, %70, %75 : vector<8x256xi32>
    %77 = arith.andi %74, %76 : vector<8x256xi1>
    %cst_27 = arith.constant 0.000000e+00 : f32
    %78 = vector.broadcast %cst_27 : f32 to vector<8x256xf32>
    %79 = arith.select %77, %72, %78 : vector<8x256xi1>, vector<8x256xf32>
    %c0_28 = arith.constant 0 : index
    %c0_29 = arith.constant 0 : index
    %c0_30 = arith.constant 0 : index
    %80 = vector.load %arg5[%c0_28, %c0_29, %c0_30] : memref<9x8x8xf32, #tpu.memory_space<vmem>>, vector<1x8x8xf32>
    %81 = vector.shape_cast %80 : vector<1x8x8xf32> to vector<8x8xf32>
    %cst_31 = arith.constant dense<0.000000e+00> : vector<8x256xf32>
    %82 = tpu.matmul %81, %79, %cst_31 {dimension_numbers = #tpu.dot_dimension_numbers<[1], [0], [0], [1], [0, 0, 1, 1], [], []>} : vector<8x8xf32>, vector<8x256xf32>, vector<8x256xf32> -> vector<8x256xf32>
    %83 = arith.addf %71, %82 : vector<8x256xf32>
    %c16_i32_32 = arith.constant 16 : i32
    %84 = tpu.dynamic_rotate %53 by %c16_i32_32 dim 1 : vector<8x256xf32>, i32 -> vector<8x256xf32>
    %c16_i32_33 = arith.constant 16 : i32
    %85 = vector.broadcast %c16_i32_33 : i32 to vector<8x256xi32>
    %86 = arith.cmpi sge, %54, %85 : vector<8x256xi32>
    %cst_34 = arith.constant 0.000000e+00 : f32
    %87 = vector.broadcast %cst_34 : f32 to vector<8x256xf32>
    %88 = arith.select %86, %84, %87 : vector<8x256xi1>, vector<8x256xf32>
    %c1_35 = arith.constant 1 : index
    %c0_36 = arith.constant 0 : index
    %c0_37 = arith.constant 0 : index
    %89 = vector.load %arg5[%c1_35, %c0_36, %c0_37] : memref<9x8x8xf32, #tpu.memory_space<vmem>>, vector<1x8x8xf32>
    %90 = vector.shape_cast %89 : vector<1x8x8xf32> to vector<8x8xf32>
    %cst_38 = arith.constant dense<0.000000e+00> : vector<8x256xf32>
    %91 = tpu.matmul %90, %88, %cst_38 {dimension_numbers = #tpu.dot_dimension_numbers<[1], [0], [0], [1], [0, 0, 1, 1], [], []>} : vector<8x8xf32>, vector<8x256xf32>, vector<8x256xf32> -> vector<8x256xf32>
    %92 = arith.addf %83, %91 : vector<8x256xf32>
    %c15_i32 = arith.constant 15 : i32
    %93 = tpu.dynamic_rotate %53 by %c15_i32 dim 1 : vector<8x256xf32>, i32 -> vector<8x256xf32>
    %c16_i32_39 = arith.constant 16 : i32
    %94 = vector.broadcast %c16_i32_39 : i32 to vector<8x256xi32>
    %95 = arith.cmpi sge, %54, %94 : vector<8x256xi32>
    %c14_i32 = arith.constant 14 : i32
    %96 = vector.broadcast %c14_i32 : i32 to vector<8x256xi32>
    %97 = arith.cmpi sle, %70, %96 : vector<8x256xi32>
    %98 = arith.andi %95, %97 : vector<8x256xi1>
    %cst_40 = arith.constant 0.000000e+00 : f32
    %99 = vector.broadcast %cst_40 : f32 to vector<8x256xf32>
    %100 = arith.select %98, %93, %99 : vector<8x256xi1>, vector<8x256xf32>
    %c2_41 = arith.constant 2 : index
    %c0_42 = arith.constant 0 : index
    %c0_43 = arith.constant 0 : index
    %101 = vector.load %arg5[%c2_41, %c0_42, %c0_43] : memref<9x8x8xf32, #tpu.memory_space<vmem>>, vector<1x8x8xf32>
    %102 = vector.shape_cast %101 : vector<1x8x8xf32> to vector<8x8xf32>
    %cst_44 = arith.constant dense<0.000000e+00> : vector<8x256xf32>
    %103 = tpu.matmul %102, %100, %cst_44 {dimension_numbers = #tpu.dot_dimension_numbers<[1], [0], [0], [1], [0, 0, 1, 1], [], []>} : vector<8x8xf32>, vector<8x256xf32>, vector<8x256xf32> -> vector<8x256xf32>
    %104 = arith.addf %92, %103 : vector<8x256xf32>
    %c1_i32_45 = arith.constant 1 : i32
    %105 = tpu.dynamic_rotate %53 by %c1_i32_45 dim 1 : vector<8x256xf32>, i32 -> vector<8x256xf32>
    %c1_i32_46 = arith.constant 1 : i32
    %106 = vector.broadcast %c1_i32_46 : i32 to vector<8x256xi32>
    %107 = arith.cmpi sge, %70, %106 : vector<8x256xi32>
    %cst_47 = arith.constant 0.000000e+00 : f32
    %108 = vector.broadcast %cst_47 : f32 to vector<8x256xf32>
    %109 = arith.select %107, %105, %108 : vector<8x256xi1>, vector<8x256xf32>
    %c3_48 = arith.constant 3 : index
    %c0_49 = arith.constant 0 : index
    %c0_50 = arith.constant 0 : index
    %110 = vector.load %arg5[%c3_48, %c0_49, %c0_50] : memref<9x8x8xf32, #tpu.memory_space<vmem>>, vector<1x8x8xf32>
    %111 = vector.shape_cast %110 : vector<1x8x8xf32> to vector<8x8xf32>
    %cst_51 = arith.constant dense<0.000000e+00> : vector<8x256xf32>
    %112 = tpu.matmul %111, %109, %cst_51 {dimension_numbers = #tpu.dot_dimension_numbers<[1], [0], [0], [1], [0, 0, 1, 1], [], []>} : vector<8x8xf32>, vector<8x256xf32>, vector<8x256xf32> -> vector<8x256xf32>
    %113 = arith.addf %104, %112 : vector<8x256xf32>
    %c4_52 = arith.constant 4 : index
    %c0_53 = arith.constant 0 : index
    %c0_54 = arith.constant 0 : index
    %114 = vector.load %arg5[%c4_52, %c0_53, %c0_54] : memref<9x8x8xf32, #tpu.memory_space<vmem>>, vector<1x8x8xf32>
    %115 = vector.shape_cast %114 : vector<1x8x8xf32> to vector<8x8xf32>
    %cst_55 = arith.constant dense<0.000000e+00> : vector<8x256xf32>
    %116 = tpu.matmul %115, %53, %cst_55 {dimension_numbers = #tpu.dot_dimension_numbers<[1], [0], [0], [1], [0, 0, 1, 1], [], []>} : vector<8x8xf32>, vector<8x256xf32>, vector<8x256xf32> -> vector<8x256xf32>
    %117 = arith.addf %113, %116 : vector<8x256xf32>
    %c255_i32 = arith.constant 255 : i32
    %118 = tpu.dynamic_rotate %53 by %c255_i32 dim 1 : vector<8x256xf32>, i32 -> vector<8x256xf32>
    %c14_i32_56 = arith.constant 14 : i32
    %119 = vector.broadcast %c14_i32_56 : i32 to vector<8x256xi32>
    %120 = arith.cmpi sle, %70, %119 : vector<8x256xi32>
    %cst_57 = arith.constant 0.000000e+00 : f32
    %121 = vector.broadcast %cst_57 : f32 to vector<8x256xf32>
    %122 = arith.select %120, %118, %121 : vector<8x256xi1>, vector<8x256xf32>
    %c5 = arith.constant 5 : index
    %c0_58 = arith.constant 0 : index
    %c0_59 = arith.constant 0 : index
    %123 = vector.load %arg5[%c5, %c0_58, %c0_59] : memref<9x8x8xf32, #tpu.memory_space<vmem>>, vector<1x8x8xf32>
    %124 = vector.shape_cast %123 : vector<1x8x8xf32> to vector<8x8xf32>
    %cst_60 = arith.constant dense<0.000000e+00> : vector<8x256xf32>
    %125 = tpu.matmul %124, %122, %cst_60 {dimension_numbers = #tpu.dot_dimension_numbers<[1], [0], [0], [1], [0, 0, 1, 1], [], []>} : vector<8x8xf32>, vector<8x256xf32>, vector<8x256xf32> -> vector<8x256xf32>
    %126 = arith.addf %117, %125 : vector<8x256xf32>
    %c241_i32 = arith.constant 241 : i32
    %127 = tpu.dynamic_rotate %53 by %c241_i32 dim 1 : vector<8x256xf32>, i32 -> vector<8x256xf32>
    %c240_i32 = arith.constant 240 : i32
    %128 = vector.broadcast %c240_i32 : i32 to vector<8x256xi32>
    %129 = arith.cmpi slt, %54, %128 : vector<8x256xi32>
    %c1_i32_61 = arith.constant 1 : i32
    %130 = vector.broadcast %c1_i32_61 : i32 to vector<8x256xi32>
    %131 = arith.cmpi sge, %70, %130 : vector<8x256xi32>
    %132 = arith.andi %129, %131 : vector<8x256xi1>
    %cst_62 = arith.constant 0.000000e+00 : f32
    %133 = vector.broadcast %cst_62 : f32 to vector<8x256xf32>
    %134 = arith.select %132, %127, %133 : vector<8x256xi1>, vector<8x256xf32>
    %c6 = arith.constant 6 : index
    %c0_63 = arith.constant 0 : index
    %c0_64 = arith.constant 0 : index
    %135 = vector.load %arg5[%c6, %c0_63, %c0_64] : memref<9x8x8xf32, #tpu.memory_space<vmem>>, vector<1x8x8xf32>
    %136 = vector.shape_cast %135 : vector<1x8x8xf32> to vector<8x8xf32>
    %cst_65 = arith.constant dense<0.000000e+00> : vector<8x256xf32>
    %137 = tpu.matmul %136, %134, %cst_65 {dimension_numbers = #tpu.dot_dimension_numbers<[1], [0], [0], [1], [0, 0, 1, 1], [], []>} : vector<8x8xf32>, vector<8x256xf32>, vector<8x256xf32> -> vector<8x256xf32>
    %138 = arith.addf %126, %137 : vector<8x256xf32>
    %c240_i32_66 = arith.constant 240 : i32
    %139 = tpu.dynamic_rotate %53 by %c240_i32_66 dim 1 : vector<8x256xf32>, i32 -> vector<8x256xf32>
    %c240_i32_67 = arith.constant 240 : i32
    %140 = vector.broadcast %c240_i32_67 : i32 to vector<8x256xi32>
    %141 = arith.cmpi slt, %54, %140 : vector<8x256xi32>
    %cst_68 = arith.constant 0.000000e+00 : f32
    %142 = vector.broadcast %cst_68 : f32 to vector<8x256xf32>
    %143 = arith.select %141, %139, %142 : vector<8x256xi1>, vector<8x256xf32>
    %c7 = arith.constant 7 : index
    %c0_69 = arith.constant 0 : index
    %c0_70 = arith.constant 0 : index
    %144 = vector.load %arg5[%c7, %c0_69, %c0_70] : memref<9x8x8xf32, #tpu.memory_space<vmem>>, vector<1x8x8xf32>
    %145 = vector.shape_cast %144 : vector<1x8x8xf32> to vector<8x8xf32>
    %cst_71 = arith.constant dense<0.000000e+00> : vector<8x256xf32>
    %146 = tpu.matmul %145, %143, %cst_71 {dimension_numbers = #tpu.dot_dimension_numbers<[1], [0], [0], [1], [0, 0, 1, 1], [], []>} : vector<8x8xf32>, vector<8x256xf32>, vector<8x256xf32> -> vector<8x256xf32>
    %147 = arith.addf %138, %146 : vector<8x256xf32>
    %c239_i32 = arith.constant 239 : i32
    %148 = tpu.dynamic_rotate %53 by %c239_i32 dim 1 : vector<8x256xf32>, i32 -> vector<8x256xf32>
    %c240_i32_72 = arith.constant 240 : i32
    %149 = vector.broadcast %c240_i32_72 : i32 to vector<8x256xi32>
    %150 = arith.cmpi slt, %54, %149 : vector<8x256xi32>
    %c14_i32_73 = arith.constant 14 : i32
    %151 = vector.broadcast %c14_i32_73 : i32 to vector<8x256xi32>
    %152 = arith.cmpi sle, %70, %151 : vector<8x256xi32>
    %153 = arith.andi %150, %152 : vector<8x256xi1>
    %cst_74 = arith.constant 0.000000e+00 : f32
    %154 = vector.broadcast %cst_74 : f32 to vector<8x256xf32>
    %155 = arith.select %153, %148, %154 : vector<8x256xi1>, vector<8x256xf32>
    %c8 = arith.constant 8 : index
    %c0_75 = arith.constant 0 : index
    %c0_76 = arith.constant 0 : index
    %156 = vector.load %arg5[%c8, %c0_75, %c0_76] : memref<9x8x8xf32, #tpu.memory_space<vmem>>, vector<1x8x8xf32>
    %157 = vector.shape_cast %156 : vector<1x8x8xf32> to vector<8x8xf32>
    %cst_77 = arith.constant dense<0.000000e+00> : vector<8x256xf32>
    %158 = tpu.matmul %157, %155, %cst_77 {dimension_numbers = #tpu.dot_dimension_numbers<[1], [0], [0], [1], [0, 0, 1, 1], [], []>} : vector<8x8xf32>, vector<8x256xf32>, vector<8x256xf32> -> vector<8x256xf32>
    %159 = arith.addf %147, %158 : vector<8x256xf32>
    %c0_78 = arith.constant 0 : index
    %c0_79 = arith.constant 0 : index
    %c0_80 = arith.constant 0 : index
    %160 = vector.load %arg6[%c0_78, %c0_79, %c0_80] : memref<1x8x256xf32, #tpu.memory_space<vmem>>, vector<1x8x256xf32>
    %161 = vector.shape_cast %160 : vector<1x8x256xf32> to vector<8x256xf32>
    %162 = vector.shape_cast %159 : vector<8x256xf32> to vector<1x8x256xf32>
    tpu.vector_store %arg6[%c0_78, %c0_79, %c0_80], %162 {strides = array<i32>} : memref<1x8x256xf32, #tpu.memory_space<vmem>>, vector<1x8x256xf32>,
    return
  }
  func.func @transform_0(%arg0: i32) -> (i32, i32, i32) {
    %c0_i32 = arith.constant 0 : i32
    %c0_i32_0 = arith.constant 0 : i32
    %c0_i32_1 = arith.constant 0 : i32
    return %arg0, %c0_i32, %c0_i32_0 : i32, i32, i32
  }
  func.func @transform_1(%arg0: i32) -> (i32, i32) {
    %c0_i32 = arith.constant 0 : i32
    %c0_i32_0 = arith.constant 0 : i32
    %c0_i32_1 = arith.constant 0 : i32
    return %c0_i32, %c0_i32_0 : i32, i32
  }
  func.func @transform_2(%arg0: i32) -> (i32, i32) {
    %c0_i32 = arith.constant 0 : i32
    %c0_i32_0 = arith.constant 0 : i32
    %c0_i32_1 = arith.constant 0 : i32
    return %c0_i32, %c0_i32_0 : i32, i32
  }
  func.func @transform_3(%arg0: i32) -> (i32, i32, i32) {
    %c0_i32 = arith.constant 0 : i32
    %c0_i32_0 = arith.constant 0 : i32
    %c0_i32_1 = arith.constant 0 : i32
    %c0_i32_2 = arith.constant 0 : i32
    return %c0_i32, %c0_i32_0, %c0_i32_1 : i32, i32, i32
  }
  func.func @transform_4(%arg0: i32) -> (i32, i32, i32) {
    %c0_i32 = arith.constant 0 : i32
    %c0_i32_0 = arith.constant 0 : i32
    %c0_i32_1 = arith.constant 0 : i32
    %c0_i32_2 = arith.constant 0 : i32
    return %c0_i32, %c0_i32_0, %c0_i32_1 : i32, i32, i32
  }
  func.func @transform_5(%arg0: i32) -> (i32, i32, i32) {
    %c0_i32 = arith.constant 0 : i32
    %c0_i32_0 = arith.constant 0 : i32
    %c0_i32_1 = arith.constant 0 : i32
    return %arg0, %c0_i32, %c0_i32_0 : i32, i32, i32
  }
}

</mosaic_0001>

<llo_original>
// kernel: tpu_custom_call.1
$region0: #{tpu_custom_call.1}
  #allocation0 [shape = 'u32[]', space=smem, size = 0x4, offset = 0x4, fixed_abs, tag = 'smem constant byte address 0x4 - core index']
  #allocation1 [shape = 'u32[144,128]{1,0:T(1,128)}', space=vmem, size = 0x12000, scoped, tag = 'internal scratch']
  %s0 = inlined_call_operand.vmem [shape: f32[2,16,256], index: 0, kind: input, shape index: {}]
  %s1 = inlined_call_operand.vmem [shape: f32[5,16], index: 1, kind: input, shape index: {}]
  %s2 = inlined_call_operand.vmem [shape: f32[5,1], index: 2, kind: input, shape index: {}]
  %s3 = inlined_call_operand.vmem [shape: f32[5,8,256], index: 3, kind: input, shape index: {}]
  %s4 = inlined_call_operand.vmem [shape: f32[9,8,8], index: 4, kind: input, shape index: {}]
  %s5 = inlined_call_operand.hbm [shape: f32[2,8,256], index: 5, kind: output, shape index: {}]
  %s6 = sld [smem:[#allocation0]]
  $region53: #{tpu_custom_call.1} parent=0
    _
  %s8 = ssub.s32 1, %s6
  %s9 = scalar_select 0, %s8, %s6
  $region1: #{tpu_custom_call.1} parent=0
    #allocation2 [shape = 'u8[16384]{0}', space=vmem, size = 0x4000, scoped, tag = 'output window, operand 0']
    #allocation3 [shape = 's32[2]{0}', space=sflag, size = 0x8, scoped, tag = 'scoped memory for tpu_custom_call.1']
    %10 = vsyncpa [#allocation3], 0
    %s11 = scalar_lea.sflag [#allocation3], 1
    %12 = vsyncpa %s11, 0
    loop: start=0, step=1, limit=4
    $region2: #{tpu_custom_call.1} parent=1 // loop_pre_header
      _
    $region3: #{tpu_custom_call.1} parent=1 // loop_header
      %s14 = sphi 0, %s18
      %p15 = scmp.ge.s32.totalorder %s14, 4
      %s24 = sphi 0, %s26
      %s27 = sphi 0, %s24
      %s28 = sphi 0, %s27
      %s44 = sphi 0, %s28
      %s48 = sphi 0, %s48
      %s50 = sphi 0, %s48
      %s51 = sphi 0, %s50
      %s65 = sphi 0, %s51
      %s69 = sphi 0, %s69
      %s71 = sphi 0, %s69
      %s72 = sphi 0, %s71
      %s86 = sphi 0, %s72
      %s90 = sphi 0, %s90
      %s92 = sphi 0, %s90
      %s93 = sphi 0, %s92
      %s107 = sphi 0, %s93
      %s111 = sphi 0, %s111
      %s113 = sphi 0, %s111
      %s114 = sphi 0, %s113
      %s128 = sphi 0, %s114
      %s134 = sphi 0, %s136
      %s137 = sphi 0, %s134
      %s138 = sphi 0, %s137
      %s154 = sphi 0, %s138
    $region4: #{tpu_custom_call.1} parent=1 // loop_header_branch
      %17 = sbr.rel (%p15) target = $region8
    $region5: #{tpu_custom_call.1} parent=1 // loop_body
      %s19 = ssub.s32 %s14, 1
      %s20 = ssub.s32 %s14, 2
      %s21 = sadd.s32 %s14, 1
      %s22 = ssub.s32 %s14, %s21
      %p23 = scmp.eq.s32.totalorder %s22, 0
      %s25 = sadd.s32 %s24, 1
      %s26 = scalar_select %p23, %s24, %s25
      %p29 = pneg %p23
      %p30 = scmp.eq.s32.totalorder %s14, 1
      %p31 = por %p29, %p30
      %p32 = scmp.ne.s32.totalorder %s24, %s27
      %p33 = scmp.eq.s32.totalorder %s14, 0
      %p34 = por %p32, %p33
      %p35 = scmp.ne.s32.totalorder %s24, %s27
      %p36 = scmp.eq.s32.totalorder %s19, 1
      %p37 = por %p35, %p36
      %p38 = scmp.ne.s32.totalorder %s27, %s28
      %p39 = scmp.eq.s32.totalorder %s19, 0
      %p40 = por %p38, %p39
      %p41 = scmp.ne.s32.totalorder %s27, %s28
      %p42 = scmp.eq.s32.totalorder %s20, 1
      %p43 = por %p41, %p42
      %p45 = scmp.ne.s32.totalorder %s28, %s44
      %p46 = scmp.eq.s32.totalorder %s20, 0
      %p47 = por %p45, %p46
      %s49 = sadd.s32 %s48, 1
      %p52 = scmp.eq.s32.totalorder %s14, 1
      %p53 = scmp.ne.s32.totalorder %s48, %s50
      %p54 = scmp.eq.s32.totalorder %s14, 0
      %p55 = por %p53, %p54
      %p56 = scmp.ne.s32.totalorder %s48, %s50
      %p57 = scmp.eq.s32.totalorder %s19, 1
      %p58 = por %p56, %p57
      %p59 = scmp.ne.s32.totalorder %s50, %s51
      %p60 = scmp.eq.s32.totalorder %s19, 0
      %p61 = por %p59, %p60
      %p62 = scmp.ne.s32.totalorder %s50, %s51
      %p63 = scmp.eq.s32.totalorder %s20, 1
      %p64 = por %p62, %p63
      %p66 = scmp.ne.s32.totalorder %s51, %s65
      %p67 = scmp.eq.s32.totalorder %s20, 0
      %p68 = por %p66, %p67
      %s70 = sadd.s32 %s69, 1
      %p73 = scmp.eq.s32.totalorder %s14, 1
      %p74 = scmp.ne.s32.totalorder %s69, %s71
      %p75 = scmp.eq.s32.totalorder %s14, 0
      %p76 = por %p74, %p75
      %p77 = scmp.ne.s32.totalorder %s69, %s71
      %p78 = scmp.eq.s32.totalorder %s19, 1
      %p79 = por %p77, %p78
      %p80 = scmp.ne.s32.totalorder %s71, %s72
      %p81 = scmp.eq.s32.totalorder %s19, 0
      %p82 = por %p80, %p81
      %p83 = scmp.ne.s32.totalorder %s71, %s72
      %p84 = scmp.eq.s32.totalorder %s20, 1
      %p85 = por %p83, %p84
      %p87 = scmp.ne.s32.totalorder %s72, %s86
      %p88 = scmp.eq.s32.totalorder %s20, 0
      %p89 = por %p87, %p88
      %s91 = sadd.s32 %s90, 1
      %p94 = scmp.eq.s32.totalorder %s14, 1
      %p95 = scmp.ne.s32.totalorder %s90, %s92
      %p96 = scmp.eq.s32.totalorder %s14, 0
      %p97 = por %p95, %p96
      %p98 = scmp.ne.s32.totalorder %s90, %s92
      %p99 = scmp.eq.s32.totalorder %s19, 1
      %p100 = por %p98, %p99
      %p101 = scmp.ne.s32.totalorder %s92, %s93
      %p102 = scmp.eq.s32.totalorder %s19, 0
      %p103 = por %p101, %p102
      %p104 = scmp.ne.s32.totalorder %s92, %s93
      %p105 = scmp.eq.s32.totalorder %s20, 1
      %p106 = por %p104, %p105
      %p108 = scmp.ne.s32.totalorder %s93, %s107
      %p109 = scmp.eq.s32.totalorder %s20, 0
      %p110 = por %p108, %p109
      %s112 = sadd.s32 %s111, 1
      %p115 = scmp.eq.s32.totalorder %s14, 1
      %p116 = scmp.ne.s32.totalorder %s111, %s113
      %p117 = scmp.eq.s32.totalorder %s14, 0
      %p118 = por %p116, %p117
      %p119 = scmp.ne.s32.totalorder %s111, %s113
      %p120 = scmp.eq.s32.totalorder %s19, 1
      %p121 = por %p119, %p120
      %p122 = scmp.ne.s32.totalorder %s113, %s114
      %p123 = scmp.eq.s32.totalorder %s19, 0
      %p124 = por %p122, %p123
      %p125 = scmp.ne.s32.totalorder %s113, %s114
      %p126 = scmp.eq.s32.totalorder %s20, 1
      %p127 = por %p125, %p126
      %p129 = scmp.ne.s32.totalorder %s114, %s128
      %p130 = scmp.eq.s32.totalorder %s20, 0
      %p131 = por %p129, %p130
      %s132 = ssub.s32 %s14, %s21
      %p133 = scmp.eq.s32.totalorder %s132, 0
      %s135 = sadd.s32 %s134, 1
      %s136 = scalar_select %p133, %s134, %s135
      %p139 = pneg %p133
      %p140 = scmp.eq.s32.totalorder %s14, 1
      %p141 = por %p139, %p140
      %p142 = scmp.ne.s32.totalorder %s134, %s137
      %p143 = scmp.eq.s32.totalorder %s14, 0
      %p144 = por %p142, %p143
      %p145 = scmp.ne.s32.totalorder %s134, %s137
      %p146 = scmp.eq.s32.totalorder %s19, 1
      %p147 = por %p145, %p146
      %p148 = scmp.ne.s32.totalorder %s137, %s138
      %p149 = scmp.eq.s32.totalorder %s19, 0
      %p150 = por %p148, %p149
      %p151 = scmp.ne.s32.totalorder %s137, %s138
      %p152 = scmp.eq.s32.totalorder %s20, 1
      %p153 = por %p151, %p152
      %p155 = scmp.ne.s32.totalorder %s138, %s154
      %p156 = scmp.eq.s32.totalorder %s20, 0
      %p157 = por %p155, %p156
      %p158 = scmp.le.s32.totalorder 1, %s14
      %p159 = scmp.lt.s32.totalorder %s14, 3
      %p160 = pnand %p158, %p159
      %p161 = pneg %p160
      // Predicated region
      $region9: #{tpu_custom_call.1} parent=5 // pred_check
        _
      $region10: #{tpu_custom_call.1} parent=5 // pred_check_branch
        %163 = sbr.rel (%p160) target = $region12
      $region11: #{tpu_custom_call.1} parent=5 // pred_region
        %s164 = ssub.s32 %s14, 1
        // Predicated region
        $region13: #{tpu_custom_call.1} parent=11 // pred_check
          %p165 = pneg %p61
        $region14: #{tpu_custom_call.1} parent=11 // pred_check_branch
          %167 = sbr.rel (%p165) target = $region16
        $region15: #{tpu_custom_call.1} parent=11 // pred_region
          _
        $region16: #{tpu_custom_call.1} parent=11 // pred_fallthru
          _
        // Predicated region
        $region17: #{tpu_custom_call.1} parent=11 // pred_check
          %p168 = pneg %p82
        $region18: #{tpu_custom_call.1} parent=11 // pred_check_branch
          %170 = sbr.rel (%p168) target = $region20
        $region19: #{tpu_custom_call.1} parent=11 // pred_region
          _
        $region20: #{tpu_custom_call.1} parent=11 // pred_fallthru
          _
        // Predicated region
        $region21: #{tpu_custom_call.1} parent=11 // pred_check
          %p171 = pneg %p103
        $region22: #{tpu_custom_call.1} parent=11 // pred_check_branch
          %173 = sbr.rel (%p171) target = $region24
        $region23: #{tpu_custom_call.1} parent=11 // pred_region
          _
        $region24: #{tpu_custom_call.1} parent=11 // pred_fallthru
          _
        // Predicated region
        $region25: #{tpu_custom_call.1} parent=11 // pred_check
          %p174 = pneg %p124
        $region26: #{tpu_custom_call.1} parent=11 // pred_check_branch
          %176 = sbr.rel (%p174) target = $region28
        $region27: #{tpu_custom_call.1} parent=11 // pred_region
          _
        $region28: #{tpu_custom_call.1} parent=11 // pred_fallthru
          _
      $region12: #{tpu_custom_call.1} parent=5 // pred_fallthru
        _
      %p177 = scmp.lt.s32.totalorder %s14, 2
      // Predicated region
      $region29: #{tpu_custom_call.1} parent=5 // pred_check
        %p178 = pneg %p177
      $region30: #{tpu_custom_call.1} parent=5 // pred_check_branch
        %180 = sbr.rel (%p178) target = $region32
      $region31: #{tpu_custom_call.1} parent=5 // pred_region
        // Predicated region
        $region33: #{tpu_custom_call.1} parent=31 // pred_check
          %p181 = pneg %p34
        $region34: #{tpu_custom_call.1} parent=31 // pred_check_branch
          %183 = sbr.rel (%p181) target = $region36
        $region35: #{tpu_custom_call.1} parent=31 // pred_region
          %p184 = scmp.lt.s32.totalorder %s14, 1
          %s185 = scalar_select %p184, %s14, 1
          %s186 = smul.addr %s185, 4
          %s187 = smul.addr %s186, 8
          %s188 = scalar_lea.vmem %s0, %s187
        $region36: #{tpu_custom_call.1} parent=31 // pred_fallthru
          _
      $region32: #{tpu_custom_call.1} parent=5 // pred_fallthru
        _
      %p189 = scmp.le.s32.totalorder 1, %s14
      %p190 = scmp.lt.s32.totalorder %s14, 3
      %p191 = pnand %p189, %p190
      %p192 = pneg %p191
      // Predicated region
      $region37: #{tpu_custom_call.1} parent=5 // pred_check
        _
      $region38: #{tpu_custom_call.1} parent=5 // pred_check_branch
        %194 = sbr.rel (%p191) target = $region40
      $region39: #{tpu_custom_call.1} parent=5 // pred_region
        %s195 = ssub.s32 %s14, 1
        %p196 = scmp.lt.s32.totalorder %s19, 1
        %s197 = scalar_select %p196, %s19, 1
        %s198 = smul.addr %s197, 4
        %s199 = smul.addr %s198, 8
        %s200 = scalar_lea.vmem %s0, %s199
        %p201 = pneg %p40
        %p202 = pneg %p37
        %p203 = pneg %p61
        %p204 = pneg %p58
        %p205 = pneg %p82
        %p206 = pneg %p79
        %p207 = pneg %p103
        %p208 = pneg %p100
        %p209 = pneg %p124
        %p210 = pneg %p121
        %p211 = pneg %p150
        %p212 = pneg %p147
        %s213 = sand.u32 %s137, 1
        %s214 = scalar_lea.sflag [#allocation3], %s213
        %s215 = sand.u32 %s137, 1
        %s216 = smul.addr %s215, 16
        %s217 = scalar_lea.vmem [#allocation2], %s216
        %p218 = scmp.lt.s32.totalorder %s19, 1
        %s219 = scalar_select %p218, %s19, 1
        %s220 = smul.addr %s219, 4
        %s221 = smul.addr %s220, 8
        %s222 = scalar_lea.vmem %s0, %s221
        %v223 = vld [vmem:[%s222] sm:$0xff]
        %v224 = vld [vmem:[%s222 + $0x8] sm:$0xff]
        %v225 = vld [vmem:[%s222 + $0x10] sm:$0xff]
        %v226 = vld [vmem:[%s222 + $0x18] sm:$0xff]
        %v227 = vadd.f32 %v223, %v224
        %228 = vadd.xlane.f32.xlu0 %v227
        %v229 = vpop.xlane.xlu0 %228
        %v230 = vadd.f32 %v225, %v226
        %231 = vadd.xlane.f32.xlu0 %v230
        %v232 = vpop.xlane.xlu0 %231
        %v233 = vrcp.pop 256.0
        %v234 = vmul.f32 %v229, %v233
        %v235 = vmul.f32 %v232, %v233
        %v236 = vld [vmem:[%s1] sm:$0x1f]
        %v237 = vld [vmem:[%s2] sm:$0x1f]
        %vm238 = vcmask 130048
        %v240 = vsel %vm238, %v236, 0
        %242 = vmatprep.subr.mxu0 0.0
        %243 = vmatpush1.msra.mxu0 %v234
        %244 = vmatprep.subr.mxu0 0.0
        %245 = vmatpush1.msra.mxu0 %v235
        %246 = vmatprep.subr.mxu0 0.0
        %247 = vmatpush1.msra.mxu0 0.0
        %248 = vmatprep.subr.mxu0 0.0
        %249 = vmatpush1.msra.mxu0 0.0
        %250 = vmatprep.subr.mxu0 0.0
        %251 = vmatpush1.msra.mxu0 0.0
        %252 = vmatprep.subr.mxu0 0.0
        %253 = vmatpush1.msra.mxu0 0.0
        %254 = vmatprep.subr.mxu0 0.0
        %255 = vmatpush1.msra.mxu0 0.0
        %256 = vmatprep.subr.mxu0 0.0
        %257 = vmatpush1.msra.mxu0 0.0
        %258 = vmatprep.subr.mxu0 0.0
        %259 = vmatpush1.msra.mxu0 0.0
        %260 = vmatprep.subr.mxu0 0.0
        %261 = vmatpush1.msra.mxu0 0.0
        %262 = vmatprep.subr.mxu0 0.0
        %263 = vmatpush1.msra.mxu0 0.0
        %264 = vmatprep.subr.mxu0 0.0
        %265 = vmatpush1.msra.mxu0 0.0
        %266 = vmatprep.subr.mxu0 0.0
        %267 = vmatpush1.msra.mxu0 0.0
        %268 = vmatprep.subr.mxu0 0.0
        %269 = vmatpush1.msra.mxu0 0.0
        %270 = vmatprep.subr.mxu0 0.0
        %271 = vmatpush1.msra.mxu0 0.0
        %272 = vmatprep.subr.mxu0 0.0
        %273 = vmatpush1.msra.mxu0 0.0
        %274 = vmatprep.subr.mxu0 0.0
        %275 = vmatpush1.msra.mxu0 0.0
        %276 = vmatprep.subr.mxu0 0.0
        %277 = vmatpush1.msra.mxu0 0.0
        %278 = vmatprep.subr.mxu0 0.0
        %279 = vmatpush1.msra.mxu0 0.0
        %280 = vmatprep.subr.mxu0 0.0
        %281 = vmatpush1.msra.mxu0 0.0
        %282 = vmatprep.subr.mxu0 0.0
        %283 = vmatpush1.msra.mxu0 0.0
        %284 = vmatprep.subr.mxu0 0.0
        %285 = vmatpush1.msra.mxu0 0.0
        %286 = vmatprep.subr.mxu0 0.0
        %287 = vmatpush1.msra.mxu0 0.0
        %288 = vmatprep.subr.mxu0 0.0
        %289 = vmatpush1.msra.mxu0 0.0
        %290 = vmatprep.subr.mxu0 0.0
        %291 = vmatpush1.msra.mxu0 0.0
        %292 = vmatprep.subr.mxu0 0.0
        %293 = vmatpush1.msra.mxu0 0.0
        %294 = vmatprep.subr.mxu0 0.0
        %295 = vmatpush1.msra.mxu0 0.0
        %296 = vmatprep.subr.mxu0 0.0
        %297 = vmatpush1.msra.mxu0 0.0
        %298 = vmatprep.subr.mxu0 0.0
        %299 = vmatpush1.msra.mxu0 0.0
        %300 = vmatprep.subr.mxu0 0.0
        %301 = vmatpush1.msra.mxu0 0.0
        %302 = vmatprep.subr.mxu0 0.0
        %303 = vmatpush1.msra.mxu0 0.0
        %304 = vmatprep.subr.mxu0 0.0
        %305 = vmatpush1.msra.mxu0 0.0
        %306 = vmatprep.mubr.f32.mxu0 0.0
        %307 = vmatmul.mubr.f32.gmra.mrb[0].mxu0 %v240
        %v308 = vpop.f32.mrb[0].mxu0
        %v309 = vadd.f32 %v237, %v308
        %v310 = vpop.f32.mrb[0].mxu0
        %311 = vdwg.mxu0
        %vm312 = vcmask 4096
        %v313 = vsel %vm312, %v309, -inf
        %v314 = vrot.slane %v313, 4
        %v315 = vmax.f32 %v313, %v314
        %v316 = vrot.slane %v315, 2
        %v317 = vmax.f32 %v315, %v316
        %v318 = vrot.slane %v317, 1
        %v319 = vmax.f32 %v317, %v318
        %v320 = vsub.f32 %v309, %v319
        %v321 = vmul.f32 %v320, 1.442695
        %v322 = vpow.pop %v321
        %v323 = vsel %vm312, %v322, 0.0
        %v324 = vrot.slane %v323, 4
        %v325 = vadd.f32 %v323, %v324
        %v326 = vrot.slane %v325, 2
        %v327 = vadd.f32 %v325, %v326
        %v328 = vrot.slane %v327, 1
        %v329 = vadd.f32 %v327, %v328
        %v330 = vrcp.pop %v329
        %v331 = vmul.f32 %v322, %v330
        %v332 = vld [vmem:[%s3] sm:$0xff]
        %v333 = vld [vmem:[%s3 + $0x8] sm:$0xff]
        %s334 = vtos %v331
        %v335 = vstv %s334
        %v336 = vmul.f32 %v332, %v335
        %v337 = vmul.f32 %v333, %v335
        %s338 = scalar_lea.vmem %s3, 16
        %v339 = vld [vmem:[%s338] sm:$0xff]
        %v340 = vld [vmem:[%s338 + $0x8] sm:$0xff]
        %v341 = vrot.slane %v331, 1
        %s342 = vtos %v341
        %v343 = vstv %s342
        %v344 = vmul.f32 %v339, %v343
        %v345 = vmul.f32 %v340, %v343
        %v346 = vadd.f32 %v336, %v344
        %v347 = vadd.f32 %v337, %v345
        %s348 = scalar_lea.vmem %s3, 32
        %v349 = vld [vmem:[%s348] sm:$0xff]
        %v350 = vld [vmem:[%s348 + $0x8] sm:$0xff]
        %v351 = vrot.slane %v331, 2
        %s352 = vtos %v351
        %v353 = vstv %s352
        %v354 = vmul.f32 %v349, %v353
        %v355 = vmul.f32 %v350, %v353
        %v356 = vadd.f32 %v346, %v354
        %v357 = vadd.f32 %v347, %v355
        %s358 = scalar_lea.vmem %s3, 48
        %v359 = vld [vmem:[%s358] sm:$0xff]
        %v360 = vld [vmem:[%s358 + $0x8] sm:$0xff]
        %v361 = vrot.slane %v331, 3
        %s362 = vtos %v361
        %v363 = vstv %s362
        %v364 = vmul.f32 %v359, %v363
        %v365 = vmul.f32 %v360, %v363
        %v366 = vadd.f32 %v356, %v364
        %v367 = vadd.f32 %v357, %v365
        %s368 = scalar_lea.vmem %s3, 64
        %v369 = vld [vmem:[%s368] sm:$0xff]
        %v370 = vld [vmem:[%s368 + $0x8] sm:$0xff]
        %v371 = vrot.slane %v331, 4
        %s372 = vtos %v371
        %v373 = vstv %s372
        %v374 = vmul.f32 %v369, %v373
        %v375 = vmul.f32 %v370, %v373
        %v376 = vadd.f32 %v366, %v374
        %v377 = vadd.f32 %v367, %v375
        %v378 = vlaneseq
        %v379 = vand.u32 %v378, 127
        %v380 = vadd.s32 %v379, 128
        %vm381 = vcmp.lt.s32.totalorder %v379, 0
        %v382 = vsub.s32 0, %v379
        %v383 = vsel %vm381, %v382, %v379
        %v384 = vshrl.u32 %v383, 4
        %v385 = vand.u32 %v383, 15
        %v386 = vsub.s32 0, %v385
        %v387 = vsel %vm381, %v386, %v385
        %vm388 = vcmp.lt.s32.totalorder %v380, 0
        %v389 = vsub.s32 0, %v380
        %v390 = vsel %vm388, %v389, %v380
        %v391 = vshrl.u32 %v390, 4
        %v392 = vand.u32 %v390, 15
        %v393 = vsub.s32 0, %v392
        %v394 = vsel %vm388, %v393, %v392
        %vm395 = vcmp.ne.s32.totalorder %v387, 0
        %vm396 = vcmp.ne.s32.totalorder %v394, 0
        %vm397 = vcmp.lt.s32.totalorder %v387, 0
        %vm398 = vcmp.lt.s32.totalorder %v394, 0
        %vm399 = vmand %vm397, %vm395
        %vm400 = vmand %vm398, %vm396
        %v401 = vadd.s32 %v387, 16
        %v402 = vadd.s32 %v394, 16
        %v403 = vsel %vm399, %v401, %v387
        %v404 = vsel %vm400, %v402, %v394
        %405 = vrot.lane.b32.xlu0 %v376, 17
        %v406 = vpop.permute.xlu0 %405
        %407 = vrot.lane.b32.xlu0 %v377, 17
        %v408 = vpop.permute.xlu0 %407
        %vm409 = vcmp.lt.s32.totalorder %v379, 17
        %v410 = vsel %vm409, %v406, %v408
        %v411 = vsel %vm409, %v408, %v406
        %vm412 = vcmp.ge.s32.totalorder %v379, 16
        %vm413 = vcmp.ge.s32.totalorder %v380, 16
        %vm414 = vcmp.ge.s32.totalorder %v403, 1
        %vm415 = vcmp.ge.s32.totalorder %v404, 1
        %vm416 = vmand %vm412, %vm414
        %vm417 = vmand %vm413, %vm415
        %v418 = vsel %vm416, %v411, 0.0
        %v419 = vsel %vm417, %v410, 0.0
        %v420 = vld [vmem:[%s4] sm:$0xff]
        %421 = vrot.lane.b32.xlu0 %v376, 16
        %v422 = vpop.permute.xlu0 %421
        %423 = vrot.lane.b32.xlu0 %v377, 16
        %v424 = vpop.permute.xlu0 %423
        %vm425 = vcmp.lt.s32.totalorder %v379, 16
        %v426 = vsel %vm425, %v422, %v424
        %v427 = vsel %vm425, %v424, %v422
        %v428 = vsel %vm412, %v427, 0.0
        %v429 = vsel %vm413, %v426, 0.0
        %s430 = scalar_lea.vmem %s4, 8
        %v431 = vld [vmem:[%s430] sm:$0xff]
        %vm432 = vcmask 64512
        %v434 = vsel %vm432, %v431, 0
        %436 = vmatprep.subr.mxu0 %v429
        %437 = vmatpush1.msra.mxu0 %v428
        %438 = vmatprep.subr.mxu0 0.0
        %439 = vmatpush1.msra.mxu0 0.0
        %440 = vmatprep.subr.mxu0 0.0
        %441 = vmatpush1.msra.mxu0 0.0
        %442 = vmatprep.subr.mxu0 0.0
        %443 = vmatpush1.msra.mxu0 0.0
        %444 = vmatprep.subr.mxu0 0.0
        %445 = vmatpush1.msra.mxu0 0.0
        %446 = vmatprep.subr.mxu0 0.0
        %447 = vmatpush1.msra.mxu0 0.0
        %448 = vmatprep.subr.mxu0 0.0
        %449 = vmatpush1.msra.mxu0 0.0
        %450 = vmatprep.subr.mxu0 0.0
        %451 = vmatpush1.msra.mxu0 0.0
        %452 = vmatprep.subr.mxu0 0.0
        %453 = vmatpush1.msra.mxu0 0.0
        %454 = vmatprep.subr.mxu0 0.0
        %455 = vmatpush1.msra.mxu0 0.0
        %456 = vmatprep.subr.mxu0 0.0
        %457 = vmatpush1.msra.mxu0 0.0
        %458 = vmatprep.subr.mxu0 0.0
        %459 = vmatpush1.msra.mxu0 0.0
        %460 = vmatprep.subr.mxu0 0.0
        %461 = vmatpush1.msra.mxu0 0.0
        %462 = vmatprep.subr.mxu0 0.0
        %463 = vmatpush1.msra.mxu0 0.0
        %464 = vmatprep.subr.mxu0 0.0
        %465 = vmatpush1.msra.mxu0 0.0
        %466 = vmatprep.subr.mxu0 0.0
        %467 = vmatpush1.msra.mxu0 0.0
        %468 = vmatprep.subr.mxu0 0.0
        %469 = vmatpush1.msra.mxu0 0.0
        %470 = vmatprep.subr.mxu0 0.0
        %471 = vmatpush1.msra.mxu0 0.0
        %472 = vmatprep.subr.mxu0 0.0
        %473 = vmatpush1.msra.mxu0 0.0
        %474 = vmatprep.subr.mxu0 0.0
        %475 = vmatpush1.msra.mxu0 0.0
        %476 = vmatprep.subr.mxu0 0.0
        %477 = vmatpush1.msra.mxu0 0.0
        %478 = vmatprep.subr.mxu0 0.0
        %479 = vmatpush1.msra.mxu0 0.0
        %480 = vmatprep.subr.mxu0 0.0
        %481 = vmatpush1.msra.mxu0 0.0
        %482 = vmatprep.subr.mxu0 0.0
        %483 = vmatpush1.msra.mxu0 0.0
        %484 = vmatprep.subr.mxu0 0.0
        %485 = vmatpush1.msra.mxu0 0.0
        %486 = vmatprep.subr.mxu0 0.0
        %487 = vmatpush1.msra.mxu0 0.0
        %488 = vmatprep.subr.mxu0 0.0
        %489 = vmatpush1.msra.mxu0 0.0
        %490 = vmatprep.subr.mxu0 0.0
        %491 = vmatpush1.msra.mxu0 0.0
        %492 = vmatprep.subr.mxu0 0.0
        %493 = vmatpush1.msra.mxu0 0.0
        %494 = vmatprep.subr.mxu0 0.0
        %495 = vmatpush1.msra.mxu0 0.0
        %496 = vmatprep.subr.mxu0 0.0
        %497 = vmatpush1.msra.mxu0 0.0
        %498 = vmatprep.subr.mxu0 0.0
        %499 = vmatpush1.msra.mxu0 0.0
        %500 = vmatprep.mubr.f32.mxu0 0.0
        %501 = vmatmul.mubr.f32.gmra.mrb[0].mxu0 %v434
        %v502 = vpop.f32.mrb[0].mxu0
        %v503 = vadd.f32 0.0, %v502
        %v504 = vpop.f32.mrb[0].mxu0
        %v505 = vadd.f32 0.0, %v504
        %506 = vdwg.mxu0
        %v508 = vsel %vm432, %v420, 0
        %510 = vmatprep.subr.mxu0 %v419
        %511 = vmatpush1.msra.mxu0 %v418
        %512 = vmatprep.subr.mxu0 0.0
        %513 = vmatpush1.msra.mxu0 0.0
        %514 = vmatprep.subr.mxu0 0.0
        %515 = vmatpush1.msra.mxu0 0.0
        %516 = vmatprep.subr.mxu0 0.0
        %517 = vmatpush1.msra.mxu0 0.0
        %518 = vmatprep.subr.mxu0 0.0
        %519 = vmatpush1.msra.mxu0 0.0
        %520 = vmatprep.subr.mxu0 0.0
        %521 = vmatpush1.msra.mxu0 0.0
        %522 = vmatprep.subr.mxu0 0.0
        %523 = vmatpush1.msra.mxu0 0.0
        %524 = vmatprep.subr.mxu0 0.0
        %525 = vmatpush1.msra.mxu0 0.0
        %526 = vmatprep.subr.mxu0 0.0
        %527 = vmatpush1.msra.mxu0 0.0
        %528 = vmatprep.subr.mxu0 0.0
        %529 = vmatpush1.msra.mxu0 0.0
        %530 = vmatprep.subr.mxu0 0.0
        %531 = vmatpush1.msra.mxu0 0.0
        %532 = vmatprep.subr.mxu0 0.0
        %533 = vmatpush1.msra.mxu0 0.0
        %534 = vmatprep.subr.mxu0 0.0
        %535 = vmatpush1.msra.mxu0 0.0
        %536 = vmatprep.subr.mxu0 0.0
        %537 = vmatpush1.msra.mxu0 0.0
        %538 = vmatprep.subr.mxu0 0.0
        %539 = vmatpush1.msra.mxu0 0.0
        %540 = vmatprep.subr.mxu0 0.0
        %541 = vmatpush1.msra.mxu0 0.0
        %542 = vmatprep.subr.mxu0 0.0
        %543 = vmatpush1.msra.mxu0 0.0
        %544 = vmatprep.subr.mxu0 0.0
        %545 = vmatpush1.msra.mxu0 0.0
        %546 = vmatprep.subr.mxu0 0.0
        %547 = vmatpush1.msra.mxu0 0.0
        %548 = vmatprep.subr.mxu0 0.0
        %549 = vmatpush1.msra.mxu0 0.0
        %550 = vmatprep.subr.mxu0 0.0
        %551 = vmatpush1.msra.mxu0 0.0
        %552 = vmatprep.subr.mxu0 0.0
        %553 = vmatpush1.msra.mxu0 0.0
        %554 = vmatprep.subr.mxu0 0.0
        %555 = vmatpush1.msra.mxu0 0.0
        %556 = vmatprep.subr.mxu0 0.0
        %557 = vmatpush1.msra.mxu0 0.0
        %558 = vmatprep.subr.mxu0 0.0
        %559 = vmatpush1.msra.mxu0 0.0
        %560 = vmatprep.subr.mxu0 0.0
        %561 = vmatpush1.msra.mxu0 0.0
        %562 = vmatprep.subr.mxu0 0.0
        %563 = vmatpush1.msra.mxu0 0.0
        %564 = vmatprep.subr.mxu0 0.0
        %565 = vmatpush1.msra.mxu0 0.0
        %566 = vmatprep.subr.mxu0 0.0
        %567 = vmatpush1.msra.mxu0 0.0
        %568 = vmatprep.subr.mxu0 0.0
        %569 = vmatpush1.msra.mxu0 0.0
        %570 = vmatprep.subr.mxu0 0.0
        %571 = vmatpush1.msra.mxu0 0.0
        %572 = vmatprep.subr.mxu0 0.0
        %573 = vmatpush1.msra.mxu0 0.0
        %574 = vmatprep.mubr.f32.mxu0 0.0
        %575 = vmatmul.mubr.f32.gmra.mrb[0].mxu0 %v508
        %v576 = vpop.f32.mrb[0].mxu0
        %v577 = vadd.f32 %v503, %v576
        %v578 = vpop.f32.mrb[0].mxu0
        %v579 = vadd.f32 %v505, %v578
        %580 = vdwg.mxu0
        %581 = vrot.lane.b32.xlu0 %v376, 15
        %v582 = vpop.permute.xlu0 %581
        %583 = vrot.lane.b32.xlu0 %v377, 15
        %v584 = vpop.permute.xlu0 %583
        %vm585 = vcmp.lt.s32.totalorder %v379, 15
        %v586 = vsel %vm585, %v582, %v584
        %v587 = vsel %vm585, %v584, %v582
        %vm588 = vcmp.le.s32.totalorder %v403, 14
        %vm589 = vcmp.le.s32.totalorder %v404, 14
        %vm590 = vmand %vm412, %vm588
        %vm591 = vmand %vm413, %vm589
        %v592 = vsel %vm590, %v587, 0.0
        %v593 = vsel %vm591, %v586, 0.0
        %s594 = scalar_lea.vmem %s4, 16
        %v595 = vld [vmem:[%s594] sm:$0xff]
        %v597 = vsel %vm432, %v595, 0
        %599 = vmatprep.subr.mxu0 %v593
        %600 = vmatpush1.msra.mxu0 %v592
        %601 = vmatprep.subr.mxu0 0.0
        %602 = vmatpush1.msra.mxu0 0.0
        %603 = vmatprep.subr.mxu0 0.0
        %604 = vmatpush1.msra.mxu0 0.0
        %605 = vmatprep.subr.mxu0 0.0
        %606 = vmatpush1.msra.mxu0 0.0
        %607 = vmatprep.subr.mxu0 0.0
        %608 = vmatpush1.msra.mxu0 0.0
        %609 = vmatprep.subr.mxu0 0.0
        %610 = vmatpush1.msra.mxu0 0.0
        %611 = vmatprep.subr.mxu0 0.0
        %612 = vmatpush1.msra.mxu0 0.0
        %613 = vmatprep.subr.mxu0 0.0
        %614 = vmatpush1.msra.mxu0 0.0
        %615 = vmatprep.subr.mxu0 0.0
        %616 = vmatpush1.msra.mxu0 0.0
        %617 = vmatprep.subr.mxu0 0.0
        %618 = vmatpush1.msra.mxu0 0.0
        %619 = vmatprep.subr.mxu0 0.0
        %620 = vmatpush1.msra.mxu0 0.0
        %621 = vmatprep.subr.mxu0 0.0
        %622 = vmatpush1.msra.mxu0 0.0
        %623 = vmatprep.subr.mxu0 0.0
        %624 = vmatpush1.msra.mxu0 0.0
        %625 = vmatprep.subr.mxu0 0.0
        %626 = vmatpush1.msra.mxu0 0.0
        %627 = vmatprep.subr.mxu0 0.0
        %628 = vmatpush1.msra.mxu0 0.0
        %629 = vmatprep.subr.mxu0 0.0
        %630 = vmatpush1.msra.mxu0 0.0
        %631 = vmatprep.subr.mxu0 0.0
        %632 = vmatpush1.msra.mxu0 0.0
        %633 = vmatprep.subr.mxu0 0.0
        %634 = vmatpush1.msra.mxu0 0.0
        %635 = vmatprep.subr.mxu0 0.0
        %636 = vmatpush1.msra.mxu0 0.0
        %637 = vmatprep.subr.mxu0 0.0
        %638 = vmatpush1.msra.mxu0 0.0
        %639 = vmatprep.subr.mxu0 0.0
        %640 = vmatpush1.msra.mxu0 0.0
        %641 = vmatprep.subr.mxu0 0.0
        %642 = vmatpush1.msra.mxu0 0.0
        %643 = vmatprep.subr.mxu0 0.0
        %644 = vmatpush1.msra.mxu0 0.0
        %645 = vmatprep.subr.mxu0 0.0
        %646 = vmatpush1.msra.mxu0 0.0
        %647 = vmatprep.subr.mxu0 0.0
        %648 = vmatpush1.msra.mxu0 0.0
        %649 = vmatprep.subr.mxu0 0.0
        %650 = vmatpush1.msra.mxu0 0.0
        %651 = vmatprep.subr.mxu0 0.0
        %652 = vmatpush1.msra.mxu0 0.0
        %653 = vmatprep.subr.mxu0 0.0
        %654 = vmatpush1.msra.mxu0 0.0
        %655 = vmatprep.subr.mxu0 0.0
        %656 = vmatpush1.msra.mxu0 0.0
        %657 = vmatprep.subr.mxu0 0.0
        %658 = vmatpush1.msra.mxu0 0.0
        %659 = vmatprep.subr.mxu0 0.0
        %660 = vmatpush1.msra.mxu0 0.0
        %661 = vmatprep.subr.mxu0 0.0
        %662 = vmatpush1.msra.mxu0 0.0
        %663 = vmatprep.mubr.f32.mxu0 0.0
        %664 = vmatmul.mubr.f32.gmra.mrb[0].mxu0 %v597
        %v665 = vpop.f32.mrb[0].mxu0
        %v666 = vadd.f32 0.0, %v665
        %v667 = vpop.f32.mrb[0].mxu0
        %v668 = vadd.f32 0.0, %v667
        %669 = vdwg.mxu0
        %v670 = vadd.f32 %v577, %v666
        %v671 = vadd.f32 %v579, %v668
        %672 = vrot.lane.b32.xlu0 %v376, 1
        %v673 = vpop.permute.xlu0 %672
        %674 = vrot.lane.b32.xlu0 %v377, 1
        %v675 = vpop.permute.xlu0 %674
        %vm676 = vcmp.lt.s32.totalorder %v379, 1
        %v677 = vsel %vm676, %v673, %v675
        %v678 = vsel %vm676, %v675, %v673
        %v679 = vsel %vm414, %v678, 0.0
        %v680 = vsel %vm415, %v677, 0.0
        %s681 = scalar_lea.vmem %s4, 24
        %v682 = vld [vmem:[%s681] sm:$0xff]
        %v684 = vsel %vm432, %v682, 0
        %686 = vmatprep.subr.mxu0 %v680
        %687 = vmatpush1.msra.mxu0 %v679
        %688 = vmatprep.subr.mxu0 0.0
        %689 = vmatpush1.msra.mxu0 0.0
        %690 = vmatprep.subr.mxu0 0.0
        %691 = vmatpush1.msra.mxu0 0.0
        %692 = vmatprep.subr.mxu0 0.0
        %693 = vmatpush1.msra.mxu0 0.0
        %694 = vmatprep.subr.mxu0 0.0
        %695 = vmatpush1.msra.mxu0 0.0
        %696 = vmatprep.subr.mxu0 0.0
        %697 = vmatpush1.msra.mxu0 0.0
        %698 = vmatprep.subr.mxu0 0.0
        %699 = vmatpush1.msra.mxu0 0.0
        %700 = vmatprep.subr.mxu0 0.0
        %701 = vmatpush1.msra.mxu0 0.0
        %702 = vmatprep.subr.mxu0 0.0
        %703 = vmatpush1.msra.mxu0 0.0
        %704 = vmatprep.subr.mxu0 0.0
        %705 = vmatpush1.msra.mxu0 0.0
        %706 = vmatprep.subr.mxu0 0.0
        %707 = vmatpush1.msra.mxu0 0.0
        %708 = vmatprep.subr.mxu0 0.0
        %709 = vmatpush1.msra.mxu0 0.0
        %710 = vmatprep.subr.mxu0 0.0
        %711 = vmatpush1.msra.mxu0 0.0
        %712 = vmatprep.subr.mxu0 0.0
        %713 = vmatpush1.msra.mxu0 0.0
        %714 = vmatprep.subr.mxu0 0.0
        %715 = vmatpush1.msra.mxu0 0.0
        %716 = vmatprep.subr.mxu0 0.0
        %717 = vmatpush1.msra.mxu0 0.0
        %718 = vmatprep.subr.mxu0 0.0
        %719 = vmatpush1.msra.mxu0 0.0
        %720 = vmatprep.subr.mxu0 0.0
        %721 = vmatpush1.msra.mxu0 0.0
        %722 = vmatprep.subr.mxu0 0.0
        %723 = vmatpush1.msra.mxu0 0.0
        %724 = vmatprep.subr.mxu0 0.0
        %725 = vmatpush1.msra.mxu0 0.0
        %726 = vmatprep.subr.mxu0 0.0
        %727 = vmatpush1.msra.mxu0 0.0
        %728 = vmatprep.subr.mxu0 0.0
        %729 = vmatpush1.msra.mxu0 0.0
        %730 = vmatprep.subr.mxu0 0.0
        %731 = vmatpush1.msra.mxu0 0.0
        %732 = vmatprep.subr.mxu0 0.0
        %733 = vmatpush1.msra.mxu0 0.0
        %734 = vmatprep.subr.mxu0 0.0
        %735 = vmatpush1.msra.mxu0 0.0
        %736 = vmatprep.subr.mxu0 0.0
        %737 = vmatpush1.msra.mxu0 0.0
        %738 = vmatprep.subr.mxu0 0.0
        %739 = vmatpush1.msra.mxu0 0.0
        %740 = vmatprep.subr.mxu0 0.0
        %741 = vmatpush1.msra.mxu0 0.0
        %742 = vmatprep.subr.mxu0 0.0
        %743 = vmatpush1.msra.mxu0 0.0
        %744 = vmatprep.subr.mxu0 0.0
        %745 = vmatpush1.msra.mxu0 0.0
        %746 = vmatprep.subr.mxu0 0.0
        %747 = vmatpush1.msra.mxu0 0.0
        %748 = vmatprep.subr.mxu0 0.0
        %749 = vmatpush1.msra.mxu0 0.0
        %750 = vmatprep.mubr.f32.mxu0 0.0
        %751 = vmatmul.mubr.f32.gmra.mrb[0].mxu0 %v684
        %v752 = vpop.f32.mrb[0].mxu0
        %v753 = vadd.f32 0.0, %v752
        %v754 = vpop.f32.mrb[0].mxu0
        %v755 = vadd.f32 0.0, %v754
        %756 = vdwg.mxu0
        %v757 = vadd.f32 %v670, %v753
        %v758 = vadd.f32 %v671, %v755
        %s759 = scalar_lea.vmem %s4, 32
        %v760 = vld [vmem:[%s759] sm:$0xff]
        %v762 = vsel %vm432, %v760, 0
        %764 = vmatprep.subr.mxu0 %v377
        %765 = vmatpush1.msra.mxu0 %v376
        %766 = vmatprep.subr.mxu0 0.0
        %767 = vmatpush1.msra.mxu0 0.0
        %768 = vmatprep.subr.mxu0 0.0
        %769 = vmatpush1.msra.mxu0 0.0
        %770 = vmatprep.subr.mxu0 0.0
        %771 = vmatpush1.msra.mxu0 0.0
        %772 = vmatprep.subr.mxu0 0.0
        %773 = vmatpush1.msra.mxu0 0.0
        %774 = vmatprep.subr.mxu0 0.0
        %775 = vmatpush1.msra.mxu0 0.0
        %776 = vmatprep.subr.mxu0 0.0
        %777 = vmatpush1.msra.mxu0 0.0
        %778 = vmatprep.subr.mxu0 0.0
        %779 = vmatpush1.msra.mxu0 0.0
        %780 = vmatprep.subr.mxu0 0.0
        %781 = vmatpush1.msra.mxu0 0.0
        %782 = vmatprep.subr.mxu0 0.0
        %783 = vmatpush1.msra.mxu0 0.0
        %784 = vmatprep.subr.mxu0 0.0
        %785 = vmatpush1.msra.mxu0 0.0
        %786 = vmatprep.subr.mxu0 0.0
        %787 = vmatpush1.msra.mxu0 0.0
        %788 = vmatprep.subr.mxu0 0.0
        %789 = vmatpush1.msra.mxu0 0.0
        %790 = vmatprep.subr.mxu0 0.0
        %791 = vmatpush1.msra.mxu0 0.0
        %792 = vmatprep.subr.mxu0 0.0
        %793 = vmatpush1.msra.mxu0 0.0
        %794 = vmatprep.subr.mxu0 0.0
        %795 = vmatpush1.msra.mxu0 0.0
        %796 = vmatprep.subr.mxu0 0.0
        %797 = vmatpush1.msra.mxu0 0.0
        %798 = vmatprep.subr.mxu0 0.0
        %799 = vmatpush1.msra.mxu0 0.0
        %800 = vmatprep.subr.mxu0 0.0
        %801 = vmatpush1.msra.mxu0 0.0
        %802 = vmatprep.subr.mxu0 0.0
        %803 = vmatpush1.msra.mxu0 0.0
        %804 = vmatprep.subr.mxu0 0.0
        %805 = vmatpush1.msra.mxu0 0.0
        %806 = vmatprep.subr.mxu0 0.0
        %807 = vmatpush1.msra.mxu0 0.0
        %808 = vmatprep.subr.mxu0 0.0
        %809 = vmatpush1.msra.mxu0 0.0
        %810 = vmatprep.subr.mxu0 0.0
        %811 = vmatpush1.msra.mxu0 0.0
        %812 = vmatprep.subr.mxu0 0.0
        %813 = vmatpush1.msra.mxu0 0.0
        %814 = vmatprep.subr.mxu0 0.0
        %815 = vmatpush1.msra.mxu0 0.0
        %816 = vmatprep.subr.mxu0 0.0
        %817 = vmatpush1.msra.mxu0 0.0
        %818 = vmatprep.subr.mxu0 0.0
        %819 = vmatpush1.msra.mxu0 0.0
        %820 = vmatprep.subr.mxu0 0.0
        %821 = vmatpush1.msra.mxu0 0.0
        %822 = vmatprep.subr.mxu0 0.0
        %823 = vmatpush1.msra.mxu0 0.0
        %824 = vmatprep.subr.mxu0 0.0
        %825 = vmatpush1.msra.mxu0 0.0
        %826 = vmatprep.subr.mxu0 0.0
        %827 = vmatpush1.msra.mxu0 0.0
        %828 = vmatprep.mubr.f32.mxu0 0.0
        %829 = vmatmul.mubr.f32.gmra.mrb[0].mxu0 %v762
        %v830 = vpop.f32.mrb[0].mxu0
        %v831 = vadd.f32 0.0, %v830
        %v832 = vpop.f32.mrb[0].mxu0
        %v833 = vadd.f32 0.0, %v832
        %834 = vdwg.mxu0
        %v835 = vadd.f32 %v757, %v831
        %v836 = vadd.f32 %v758, %v833
        %837 = vrot.lane.b32.xlu0 %v376, 127
        %v838 = vpop.permute.xlu0 %837
        %839 = vrot.lane.b32.xlu0 %v377, 127
        %v840 = vpop.permute.xlu0 %839
        %vm841 = vcmp.lt.s32.totalorder %v379, 127
        %v842 = vsel %vm841, %v838, %v840
        %v843 = vsel %vm841, %v840, %v838
        %v844 = vsel %vm588, %v842, 0.0
        %v845 = vsel %vm589, %v843, 0.0
        %s846 = scalar_lea.vmem %s4, 40
        %v847 = vld [vmem:[%s846] sm:$0xff]
        %v849 = vsel %vm432, %v847, 0
        %851 = vmatprep.subr.mxu0 %v845
        %852 = vmatpush1.msra.mxu0 %v844
        %853 = vmatprep.subr.mxu0 0.0
        %854 = vmatpush1.msra.mxu0 0.0
        %855 = vmatprep.subr.mxu0 0.0
        %856 = vmatpush1.msra.mxu0 0.0
        %857 = vmatprep.subr.mxu0 0.0
        %858 = vmatpush1.msra.mxu0 0.0
        %859 = vmatprep.subr.mxu0 0.0
        %860 = vmatpush1.msra.mxu0 0.0
        %861 = vmatprep.subr.mxu0 0.0
        %862 = vmatpush1.msra.mxu0 0.0
        %863 = vmatprep.subr.mxu0 0.0
        %864 = vmatpush1.msra.mxu0 0.0
        %865 = vmatprep.subr.mxu0 0.0
        %866 = vmatpush1.msra.mxu0 0.0
        %867 = vmatprep.subr.mxu0 0.0
        %868 = vmatpush1.msra.mxu0 0.0
        %869 = vmatprep.subr.mxu0 0.0
        %870 = vmatpush1.msra.mxu0 0.0
        %871 = vmatprep.subr.mxu0 0.0
        %872 = vmatpush1.msra.mxu0 0.0
        %873 = vmatprep.subr.mxu0 0.0
        %874 = vmatpush1.msra.mxu0 0.0
        %875 = vmatprep.subr.mxu0 0.0
        %876 = vmatpush1.msra.mxu0 0.0
        %877 = vmatprep.subr.mxu0 0.0
        %878 = vmatpush1.msra.mxu0 0.0
        %879 = vmatprep.subr.mxu0 0.0
        %880 = vmatpush1.msra.mxu0 0.0
        %881 = vmatprep.subr.mxu0 0.0
        %882 = vmatpush1.msra.mxu0 0.0
        %883 = vmatprep.subr.mxu0 0.0
        %884 = vmatpush1.msra.mxu0 0.0
        %885 = vmatprep.subr.mxu0 0.0
        %886 = vmatpush1.msra.mxu0 0.0
        %887 = vmatprep.subr.mxu0 0.0
        %888 = vmatpush1.msra.mxu0 0.0
        %889 = vmatprep.subr.mxu0 0.0
        %890 = vmatpush1.msra.mxu0 0.0
        %891 = vmatprep.subr.mxu0 0.0
        %892 = vmatpush1.msra.mxu0 0.0
        %893 = vmatprep.subr.mxu0 0.0
        %894 = vmatpush1.msra.mxu0 0.0
        %895 = vmatprep.subr.mxu0 0.0
        %896 = vmatpush1.msra.mxu0 0.0
        %897 = vmatprep.subr.mxu0 0.0
        %898 = vmatpush1.msra.mxu0 0.0
        %899 = vmatprep.subr.mxu0 0.0
        %900 = vmatpush1.msra.mxu0 0.0
        %901 = vmatprep.subr.mxu0 0.0
        %902 = vmatpush1.msra.mxu0 0.0
        %903 = vmatprep.subr.mxu0 0.0
        %904 = vmatpush1.msra.mxu0 0.0
        %905 = vmatprep.subr.mxu0 0.0
        %906 = vmatpush1.msra.mxu0 0.0
        %907 = vmatprep.subr.mxu0 0.0
        %908 = vmatpush1.msra.mxu0 0.0
        %909 = vmatprep.subr.mxu0 0.0
        %910 = vmatpush1.msra.mxu0 0.0
        %911 = vmatprep.subr.mxu0 0.0
        %912 = vmatpush1.msra.mxu0 0.0
        %913 = vmatprep.subr.mxu0 0.0
        %914 = vmatpush1.msra.mxu0 0.0
        %915 = vmatprep.mubr.f32.mxu0 0.0
        %916 = vmatmul.mubr.f32.gmra.mrb[0].mxu0 %v849
        %v917 = vpop.f32.mrb[0].mxu0
        %v918 = vadd.f32 0.0, %v917
        %v919 = vpop.f32.mrb[0].mxu0
        %v920 = vadd.f32 0.0, %v919
        %921 = vdwg.mxu0
        %v922 = vadd.f32 %v835, %v918
        %v923 = vadd.f32 %v836, %v920
        %924 = vrot.lane.b32.xlu0 %v376, 113
        %v925 = vpop.permute.xlu0 %924
        %926 = vrot.lane.b32.xlu0 %v377, 113
        %v927 = vpop.permute.xlu0 %926
        %vm928 = vcmp.lt.s32.totalorder %v379, 113
        %v929 = vsel %vm928, %v925, %v927
        %v930 = vsel %vm928, %v927, %v925
        %vm931 = vcmp.lt.s32.totalorder %v379, 240
        %vm932 = vcmp.lt.s32.totalorder %v380, 240
        %vm933 = vmand %vm931, %vm414
        %vm934 = vmand %vm932, %vm415
        %v935 = vsel %vm933, %v929, 0.0
        %v936 = vsel %vm934, %v930, 0.0
        %s937 = scalar_lea.vmem %s4, 48
        %v938 = vld [vmem:[%s937] sm:$0xff]
        %v940 = vsel %vm432, %v938, 0
        %942 = vmatprep.subr.mxu0 %v936
        %943 = vmatpush1.msra.mxu0 %v935
        %944 = vmatprep.subr.mxu0 0.0
        %945 = vmatpush1.msra.mxu0 0.0
        %946 = vmatprep.subr.mxu0 0.0
        %947 = vmatpush1.msra.mxu0 0.0
        %948 = vmatprep.subr.mxu0 0.0
        %949 = vmatpush1.msra.mxu0 0.0
        %950 = vmatprep.subr.mxu0 0.0
        %951 = vmatpush1.msra.mxu0 0.0
        %952 = vmatprep.subr.mxu0 0.0
        %953 = vmatpush1.msra.mxu0 0.0
        %954 = vmatprep.subr.mxu0 0.0
        %955 = vmatpush1.msra.mxu0 0.0
        %956 = vmatprep.subr.mxu0 0.0
        %957 = vmatpush1.msra.mxu0 0.0
        %958 = vmatprep.subr.mxu0 0.0
        %959 = vmatpush1.msra.mxu0 0.0
        %960 = vmatprep.subr.mxu0 0.0
        %961 = vmatpush1.msra.mxu0 0.0
        %962 = vmatprep.subr.mxu0 0.0
        %963 = vmatpush1.msra.mxu0 0.0
        %964 = vmatprep.subr.mxu0 0.0
        %965 = vmatpush1.msra.mxu0 0.0
        %966 = vmatprep.subr.mxu0 0.0
        %967 = vmatpush1.msra.mxu0 0.0
        %968 = vmatprep.subr.mxu0 0.0
        %969 = vmatpush1.msra.mxu0 0.0
        %970 = vmatprep.subr.mxu0 0.0
        %971 = vmatpush1.msra.mxu0 0.0
        %972 = vmatprep.subr.mxu0 0.0
        %973 = vmatpush1.msra.mxu0 0.0
        %974 = vmatprep.subr.mxu0 0.0
        %975 = vmatpush1.msra.mxu0 0.0
        %976 = vmatprep.subr.mxu0 0.0
        %977 = vmatpush1.msra.mxu0 0.0
        %978 = vmatprep.subr.mxu0 0.0
        %979 = vmatpush1.msra.mxu0 0.0
        %980 = vmatprep.subr.mxu0 0.0
        %981 = vmatpush1.msra.mxu0 0.0
        %982 = vmatprep.subr.mxu0 0.0
        %983 = vmatpush1.msra.mxu0 0.0
        %984 = vmatprep.subr.mxu0 0.0
        %985 = vmatpush1.msra.mxu0 0.0
        %986 = vmatprep.subr.mxu0 0.0
        %987 = vmatpush1.msra.mxu0 0.0
        %988 = vmatprep.subr.mxu0 0.0
        %989 = vmatpush1.msra.mxu0 0.0
        %990 = vmatprep.subr.mxu0 0.0
        %991 = vmatpush1.msra.mxu0 0.0
        %992 = vmatprep.subr.mxu0 0.0
        %993 = vmatpush1.msra.mxu0 0.0
        %994 = vmatprep.subr.mxu0 0.0
        %995 = vmatpush1.msra.mxu0 0.0
        %996 = vmatprep.subr.mxu0 0.0
        %997 = vmatpush1.msra.mxu0 0.0
        %998 = vmatprep.subr.mxu0 0.0
        %999 = vmatpush1.msra.mxu0 0.0
        %1000 = vmatprep.subr.mxu0 0.0
        %1001 = vmatpush1.msra.mxu0 0.0
        %1002 = vmatprep.subr.mxu0 0.0
        %1003 = vmatpush1.msra.mxu0 0.0
        %1004 = vmatprep.subr.mxu0 0.0
        %1005 = vmatpush1.msra.mxu0 0.0
        %1006 = vmatprep.mubr.f32.mxu0 0.0
        %1007 = vmatmul.mubr.f32.gmra.mrb[0].mxu0 %v940
        %v1008 = vpop.f32.mrb[0].mxu0
        %v1009 = vadd.f32 0.0, %v1008
        %v1010 = vpop.f32.mrb[0].mxu0
        %v1011 = vadd.f32 0.0, %v1010
        %1012 = vdwg.mxu0
        %v1013 = vadd.f32 %v922, %v1009
        %v1014 = vadd.f32 %v923, %v1011
        %1015 = vrot.lane.b32.xlu0 %v376, 112
        %v1016 = vpop.permute.xlu0 %1015
        %1017 = vrot.lane.b32.xlu0 %v377, 112
        %v1018 = vpop.permute.xlu0 %1017
        %vm1019 = vcmp.lt.s32.totalorder %v379, 112
        %v1020 = vsel %vm1019, %v1016, %v1018
        %v1021 = vsel %vm1019, %v1018, %v1016
        %v1022 = vsel %vm931, %v1020, 0.0
        %v1023 = vsel %vm932, %v1021, 0.0
        %s1024 = scalar_lea.vmem %s4, 56
        %v1025 = vld [vmem:[%s1024] sm:$0xff]
        %v1027 = vsel %vm432, %v1025, 0
        %1029 = vmatprep.subr.mxu0 %v1023
        %1030 = vmatpush1.msra.mxu0 %v1022
        %1031 = vmatprep.subr.mxu0 0.0
        %1032 = vmatpush1.msra.mxu0 0.0
        %1033 = vmatprep.subr.mxu0 0.0
        %1034 = vmatpush1.msra.mxu0 0.0
        %1035 = vmatprep.subr.mxu0 0.0
        %1036 = vmatpush1.msra.mxu0 0.0
        %1037 = vmatprep.subr.mxu0 0.0
        %1038 = vmatpush1.msra.mxu0 0.0
        %1039 = vmatprep.subr.mxu0 0.0
        %1040 = vmatpush1.msra.mxu0 0.0
        %1041 = vmatprep.subr.mxu0 0.0
        %1042 = vmatpush1.msra.mxu0 0.0
        %1043 = vmatprep.subr.mxu0 0.0
        %1044 = vmatpush1.msra.mxu0 0.0
        %1045 = vmatprep.subr.mxu0 0.0
        %1046 = vmatpush1.msra.mxu0 0.0
        %1047 = vmatprep.subr.mxu0 0.0
        %1048 = vmatpush1.msra.mxu0 0.0
        %1049 = vmatprep.subr.mxu0 0.0
        %1050 = vmatpush1.msra.mxu0 0.0
        %1051 = vmatprep.subr.mxu0 0.0
        %1052 = vmatpush1.msra.mxu0 0.0
        %1053 = vmatprep.subr.mxu0 0.0
        %1054 = vmatpush1.msra.mxu0 0.0
        %1055 = vmatprep.subr.mxu0 0.0
        %1056 = vmatpush1.msra.mxu0 0.0
        %1057 = vmatprep.subr.mxu0 0.0
        %1058 = vmatpush1.msra.mxu0 0.0
        %1059 = vmatprep.subr.mxu0 0.0
        %1060 = vmatpush1.msra.mxu0 0.0
        %1061 = vmatprep.subr.mxu0 0.0
        %1062 = vmatpush1.msra.mxu0 0.0
        %1063 = vmatprep.subr.mxu0 0.0
        %1064 = vmatpush1.msra.mxu0 0.0
        %1065 = vmatprep.subr.mxu0 0.0
        %1066 = vmatpush1.msra.mxu0 0.0
        %1067 = vmatprep.subr.mxu0 0.0
        %1068 = vmatpush1.msra.mxu0 0.0
        %1069 = vmatprep.subr.mxu0 0.0
        %1070 = vmatpush1.msra.mxu0 0.0
        %1071 = vmatprep.subr.mxu0 0.0
        %1072 = vmatpush1.msra.mxu0 0.0
        %1073 = vmatprep.subr.mxu0 0.0
        %1074 = vmatpush1.msra.mxu0 0.0
        %1075 = vmatprep.subr.mxu0 0.0
        %1076 = vmatpush1.msra.mxu0 0.0
        %1077 = vmatprep.subr.mxu0 0.0
        %1078 = vmatpush1.msra.mxu0 0.0
        %1079 = vmatprep.subr.mxu0 0.0
        %1080 = vmatpush1.msra.mxu0 0.0
        %1081 = vmatprep.subr.mxu0 0.0
        %1082 = vmatpush1.msra.mxu0 0.0
        %1083 = vmatprep.subr.mxu0 0.0
        %1084 = vmatpush1.msra.mxu0 0.0
        %1085 = vmatprep.subr.mxu0 0.0
        %1086 = vmatpush1.msra.mxu0 0.0
        %1087 = vmatprep.subr.mxu0 0.0
        %1088 = vmatpush1.msra.mxu0 0.0
        %1089 = vmatprep.subr.mxu0 0.0
        %1090 = vmatpush1.msra.mxu0 0.0
        %1091 = vmatprep.subr.mxu0 0.0
        %1092 = vmatpush1.msra.mxu0 0.0
        %1093 = vmatprep.mubr.f32.mxu0 0.0
        %1094 = vmatmul.mubr.f32.gmra.mrb[0].mxu0 %v1027
        %v1095 = vpop.f32.mrb[0].mxu0
        %v1096 = vadd.f32 0.0, %v1095
        %v1097 = vpop.f32.mrb[0].mxu0
        %v1098 = vadd.f32 0.0, %v1097
        %1099 = vdwg.mxu0
        %v1100 = vadd.f32 %v1013, %v1096
        %v1101 = vadd.f32 %v1014, %v1098
        %1102 = vrot.lane.b32.xlu0 %v376, 111
        %v1103 = vpop.permute.xlu0 %1102
        %1104 = vrot.lane.b32.xlu0 %v377, 111
        %v1105 = vpop.permute.xlu0 %1104
        %vm1106 = vcmp.lt.s32.totalorder %v379, 111
        %v1107 = vsel %vm1106, %v1103, %v1105
        %v1108 = vsel %vm1106, %v1105, %v1103
        %vm1109 = vmand %vm931, %vm588
        %vm1110 = vmand %vm932, %vm589
        %v1111 = vsel %vm1109, %v1107, 0.0
        %v1112 = vsel %vm1110, %v1108, 0.0
        %s1113 = scalar_lea.vmem %s4, 64
        %v1114 = vld [vmem:[%s1113] sm:$0xff]
        %v1116 = vsel %vm432, %v1114, 0
        %1118 = vmatprep.subr.mxu0 %v1112
        %1119 = vmatpush1.msra.mxu0 %v1111
        %1120 = vmatprep.subr.mxu0 0.0
        %1121 = vmatpush1.msra.mxu0 0.0
        %1122 = vmatprep.subr.mxu0 0.0
        %1123 = vmatpush1.msra.mxu0 0.0
        %1124 = vmatprep.subr.mxu0 0.0
        %1125 = vmatpush1.msra.mxu0 0.0
        %1126 = vmatprep.subr.mxu0 0.0
        %1127 = vmatpush1.msra.mxu0 0.0
        %1128 = vmatprep.subr.mxu0 0.0
        %1129 = vmatpush1.msra.mxu0 0.0
        %1130 = vmatprep.subr.mxu0 0.0
        %1131 = vmatpush1.msra.mxu0 0.0
        %1132 = vmatprep.subr.mxu0 0.0
        %1133 = vmatpush1.msra.mxu0 0.0
        %1134 = vmatprep.subr.mxu0 0.0
        %1135 = vmatpush1.msra.mxu0 0.0
        %1136 = vmatprep.subr.mxu0 0.0
        %1137 = vmatpush1.msra.mxu0 0.0
        %1138 = vmatprep.subr.mxu0 0.0
        %1139 = vmatpush1.msra.mxu0 0.0
        %1140 = vmatprep.subr.mxu0 0.0
        %1141 = vmatpush1.msra.mxu0 0.0
        %1142 = vmatprep.subr.mxu0 0.0
        %1143 = vmatpush1.msra.mxu0 0.0
        %1144 = vmatprep.subr.mxu0 0.0
        %1145 = vmatpush1.msra.mxu0 0.0
        %1146 = vmatprep.subr.mxu0 0.0
        %1147 = vmatpush1.msra.mxu0 0.0
        %1148 = vmatprep.subr.mxu0 0.0
        %1149 = vmatpush1.msra.mxu0 0.0
        %1150 = vmatprep.subr.mxu0 0.0
        %1151 = vmatpush1.msra.mxu0 0.0
        %1152 = vmatprep.subr.mxu0 0.0
        %1153 = vmatpush1.msra.mxu0 0.0
        %1154 = vmatprep.subr.mxu0 0.0
        %1155 = vmatpush1.msra.mxu0 0.0
        %1156 = vmatprep.subr.mxu0 0.0
        %1157 = vmatpush1.msra.mxu0 0.0
        %1158 = vmatprep.subr.mxu0 0.0
        %1159 = vmatpush1.msra.mxu0 0.0
        %1160 = vmatprep.subr.mxu0 0.0
        %1161 = vmatpush1.msra.mxu0 0.0
        %1162 = vmatprep.subr.mxu0 0.0
        %1163 = vmatpush1.msra.mxu0 0.0
        %1164 = vmatprep.subr.mxu0 0.0
        %1165 = vmatpush1.msra.mxu0 0.0
        %1166 = vmatprep.subr.mxu0 0.0
        %1167 = vmatpush1.msra.mxu0 0.0
        %1168 = vmatprep.subr.mxu0 0.0
        %1169 = vmatpush1.msra.mxu0 0.0
        %1170 = vmatprep.subr.mxu0 0.0
        %1171 = vmatpush1.msra.mxu0 0.0
        %1172 = vmatprep.subr.mxu0 0.0
        %1173 = vmatpush1.msra.mxu0 0.0
        %1174 = vmatprep.subr.mxu0 0.0
        %1175 = vmatpush1.msra.mxu0 0.0
        %1176 = vmatprep.subr.mxu0 0.0
        %1177 = vmatpush1.msra.mxu0 0.0
        %1178 = vmatprep.subr.mxu0 0.0
        %1179 = vmatpush1.msra.mxu0 0.0
        %1180 = vmatprep.subr.mxu0 0.0
        %1181 = vmatpush1.msra.mxu0 0.0
        %1182 = vmatprep.mubr.f32.mxu0 0.0
        %1183 = vmatmul.mubr.f32.gmra.mrb[0].mxu0 %v1116
        %v1184 = vpop.f32.mrb[0].mxu0
        %v1185 = vadd.f32 0.0, %v1184
        %v1186 = vpop.f32.mrb[0].mxu0
        %v1187 = vadd.f32 0.0, %v1186
        %1188 = vdwg.mxu0
        %v1189 = vadd.f32 %v1100, %v1185
        %v1190 = vadd.f32 %v1101, %v1187
        %1191 = vst [vmem:[%s217] sm:$0xff] %v1189
        %1192 = vst [vmem:[%s217 + $0x8] sm:$0xff] %v1190
        %s1193 = sand.u32 %s137, 1
        %s1194 = scalar_lea.sflag [#allocation3], %s1193
        %s1195 = sand.u32 %s137, 1
        %s1196 = smul.addr %s1195, 16
        %s1197 = scalar_lea.vmem [#allocation2], %s1196
        // Predicated region
        $region41: #{tpu_custom_call.1} parent=39 // pred_check
          %p1198 = pneg %p147
        $region42: #{tpu_custom_call.1} parent=39 // pred_check_branch
          %1200 = sbr.rel (%p1198) target = $region44
        $region43: #{tpu_custom_call.1} parent=39 // pred_region
          %s1202 = ssub.s32 256, 256
          %1203 = vsyncadd %s1194, %s1202
          %s1204 = smul.addr %s19, 2
          %s1205 = smul.addr %s1204, 128
          %s1206 = scalar_lea.hbm %s5, %s1205
          %s1208 = sshll.u32 %s1197, 4
          %s1209 = int_to_ptr.vmem [resolvable:$true] %s1208
          %1211 = dma.vmem_to_hbm [thread:$0]  %s1209, 256, %s1206, %s1194
        $region44: #{tpu_custom_call.1} parent=39 // pred_fallthru
          _
      $region40: #{tpu_custom_call.1} parent=5 // pred_fallthru
        _
      %p1212 = scmp.le.s32.totalorder 2, %s14
      // Predicated region
      $region45: #{tpu_custom_call.1} parent=5 // pred_check
        %p1213 = pneg %p1212
      $region46: #{tpu_custom_call.1} parent=5 // pred_check_branch
        %1215 = sbr.rel (%p1213) target = $region48
      $region47: #{tpu_custom_call.1} parent=5 // pred_region
        %s1216 = ssub.s32 %s14, 2
        // Predicated region
        $region49: #{tpu_custom_call.1} parent=47 // pred_check
          %p1217 = pneg %p153
        $region50: #{tpu_custom_call.1} parent=47 // pred_check_branch
          %1219 = sbr.rel (%p1217) target = $region52
        $region51: #{tpu_custom_call.1} parent=47 // pred_region
          %s1220 = sand.u32 %s138, 1
          %s1221 = scalar_lea.sflag [#allocation3], %s1220
          %s1222 = sand.u32 %s138, 1
          %s1223 = smul.addr %s1222, 16
          %s1224 = scalar_lea.vmem [#allocation2], %s1223
          %1225 = dma.done %s1221, 256
        $region52: #{tpu_custom_call.1} parent=47 // pred_fallthru
          _
      $region48: #{tpu_custom_call.1} parent=5 // pred_fallthru
        _
    $region6: #{tpu_custom_call.1} parent=1 // loop_footer
      %s18 = sadd.s32 1, %s14
    $region7: #{tpu_custom_call.1} parent=1 // loop_footer_branch
      %13 = sbr.rel target = $region3
    $region8: #{tpu_custom_call.1} parent=1 // loop_exit
      _
    %1226 = vsyncpa [#allocation3], 1
    %s1227 = scalar_lea.sflag [#allocation3], 1
    %1228 = vsyncpa %s1227, 1

</llo_original>
